<compile_context>
chip_gen: v5e
topology: v5e:2x2
jax: 0.10.0
libtpu: 0.0.40
codegen_flags: <defaults>
</compile_context>

<pallas_src>
import jax
import jax.numpy as jnp
from jax import lax
from jax.experimental import pallas as pl
from jax.experimental.pallas import tpu as pltpu


# ---------------------------------------------------------------------------
# Fused kernel: embed (Linear+LeakyReLU) + layer-0 input-gate precompute
#               + 2-layer LSTM recurrence -> last-timestep hidden of layer 2
# ---------------------------------------------------------------------------
def encoder_kernel(x_ref, we_ref, be_ref,
                   wih0_ref, whh0_ref, b0_ref,
                   w1_ref, b1_ref,
                   o_ref, gx_ref):
    # x: (B, T, D_in)  batch-first, as handed in by the host
    # we: (D_in, H), be: (1, H)
    # wih0/whh0: (H, 4H), b0: (1, 4H)          (b0 = b_ih0 + b_hh0)
    # w1: (2H, 4H) = concat([w_ih1, w_hh1], axis=0), b1: (1, 4H)
    # o:  (B, H)
    # gx_ref scratch: (T, B, 4H) — precomputed layer-0 input-side gates (+ b0)
    B, T, D_in = x_ref.shape
    H = we_ref.shape[1]

    # ---------------- prologue: one large matmul pass -----------------------
    x2d = x_ref[...].reshape(B * T, D_in)
    emb = jnp.dot(x2d, we_ref[...], preferred_element_type=jnp.float32) + be_ref[...]
    emb = jnp.where(emb > 0, emb, 0.2 * emb)          # LeakyReLU(0.2)
    gx = jnp.dot(emb, wih0_ref[...], preferred_element_type=jnp.float32) + b0_ref[...]
    gx = gx.reshape(B, T, 4 * H)
    # batch-first -> time-major scratch (static unroll over small B; avoids an
    # in-kernel 3-D transpose and any HBM layout change).
    for b in range(B):
        gx_ref[:, b, :] = gx[b]

    # ------------- hoist loop-invariant weights / biases / masks ------------
    whh0 = whh0_ref[...]          # (H, 4H)
    w1 = w1_ref[...]              # (2H, 4H)
    b1 = b1_ref[...]              # (1, 4H)

    # Gate layout is (i, f, g, o) along the last axis; only g uses tanh.
    lane = lax.broadcasted_iota(jnp.int32, (B, 4 * H), 1)
    is_g = (lane >= 2 * H) & (lane < 3 * H)

    def activate(gates):
        # single full-vreg EUP pass: sigmoid(x) = 0.5 * tanh(0.5 x) + 0.5
        t = jnp.tanh(jnp.where(is_g, gates, 0.5 * gates))
        return jnp.where(is_g, t, 0.5 * t + 0.5)

    def lstm_update(act, c):
        i = act[:, 0 * H:1 * H]
        f = act[:, 1 * H:2 * H]
        g = act[:, 2 * H:3 * H]
        o = act[:, 3 * H:4 * H]
        c_new = f * c + i * g
        h_new = o * jnp.tanh(c_new)
        return h_new, c_new

    def step(t, carry):
        h0, c0, h1, c1 = carry
        # layer 0: input-side contribution precomputed; one recurrent matmul
        g0 = gx_ref[t].reshape(B, 4 * H) + jnp.dot(
            h0, whh0, preferred_element_type=jnp.float32)
        h0, c0 = lstm_update(activate(g0), c0)
        # layer 1: single fused [x ; h] matmul on the critical path
        xh = jnp.concatenate([h0, h1], axis=1)                       # (B, 2H)
        g1 = jnp.dot(xh, w1, preferred_element_type=jnp.float32) + b1
        h1, c1 = lstm_update(activate(g1), c1)
        return (h0, c0, h1, c1)

    zeros = jnp.zeros((B, H), jnp.float32)
    _, _, h1, _ = lax.fori_loop(0, T, step, (zeros, zeros, zeros, zeros),
                                unroll=True)
    o_ref[...] = h1


# ---------------------------------------------------------------------------
# Wrapper
# ---------------------------------------------------------------------------
def encoder_forward(obsv, params):
    """obsv: (B, T, D_in) float32  ->  (B, 1, H) float32 (== y[:, -1:, :])."""
    B, T, D_in = obsv.shape
    H = params["w_embed"].shape[1]
    # Fuse layer-1 input/recurrent weights once: (2H, 4H)
    w1 = jnp.concatenate([params["w_ih1"], params["w_hh1"]], axis=0)

    vmem = pl.BlockSpec(memory_space=pltpu.MemorySpace.VMEM)
    h_last = pl.pallas_call(
        encoder_kernel,
        out_shape=jax.ShapeDtypeStruct((B, H), jnp.float32),
        in_specs=[vmem] * 8,
        out_specs=vmem,
        scratch_shapes=[pltpu.VMEM((T, B, 4 * H), jnp.float32)],
    )(obsv,
      params["w_embed"], params["b_embed"],
      params["w_ih0"], params["w_hh0"], params["b0"],
      w1, params["b1"])

    return h_last.reshape(B, 1, H)


# ---------------------------------------------------------------------------
# Pure-JAX reference (for correctness check)
# ---------------------------------------------------------------------------
def encoder_reference(obsv, params):
    B, T, D_in = obsv.shape
    H = params["w_embed"].shape[1]
    y = obsv @ params["w_embed"] + params["b_embed"][0]
    y = jnp.where(y > 0, y, 0.2 * y)

    def cell(x_t, h, c, wih, whh, b):
        gates = x_t @ wih + h @ whh + b[0]
        i = jax.nn.sigmoid(gates[:, 0 * H:1 * H])
        f = jax.nn.sigmoid(gates[:, 1 * H:2 * H])
        g = jnp.tanh(gates[:, 2 * H:3 * H])
        o = jax.nn.sigmoid(gates[:, 3 * H:4 * H])
        c = f * c + i * g
        return o * jnp.tanh(c), c

    h0 = c0 = h1 = c1 = jnp.zeros((B, H), jnp.float32)
    for t in range(T):
        h0, c0 = cell(y[:, t, :], h0, c0, params["w_ih0"], params["w_hh0"], params["b0"])
        h1, c1 = cell(h0, h1, c1, params["w_ih1"], params["w_hh1"], params["b1"])
    return h1.reshape(B, 1, H)


# ---------------------------------------------------------------------------
# Deterministic parameter init (shapes from Encoder.__init__)
# ---------------------------------------------------------------------------
def init_params(key, input_size, encoding_size):
    H = encoding_size
    ks = jax.random.split(key, 8)
    s_emb = 1.0 / jnp.sqrt(input_size)
    s_rec = 1.0 / jnp.sqrt(H)
    u = lambda k, shape, s: jax.random.uniform(k, shape, jnp.float32, -s, s)
    return {
        # nn.Linear(input_size, H): weight (H, D_in) stored transposed (D_in, H)
        "w_embed": u(ks[0], (input_size, H), s_emb),
        "b_embed": u(ks[1], (1, H), s_emb),
        # LSTM layer 0: weight_ih_l0 (4H, H) stored transposed; biases combined
        "w_ih0": u(ks[2], (H, 4 * H), s_rec),
        "w_hh0": u(ks[3], (H, 4 * H), s_rec),
        "b0":    u(ks[4], (1, 4 * H), s_rec),
        # LSTM layer 1
        "w_ih1": u(ks[5], (H, 4 * H), s_rec),
        "w_hh1": u(ks[6], (H, 4 * H), s_rec),
        "b1":    u(ks[7], (1, 4 * H), s_rec),
    }


if __name__ == "__main__":
    B, T, D_IN, H = 2, 8, 16, 32
    key = jax.random.PRNGKey(0)
    k_x, k_p = jax.random.split(key)
    obsv = jax.random.normal(k_x, (B, T, D_IN), jnp.float32)
    params = init_params(k_p, D_IN, H)

    out = encoder_forward(obsv, params)
    out = jax.block_until_ready(out)

    ref = encoder_reference(obsv, params)
    assert out.shape == (B, 1, H), out.shape
    assert jnp.allclose(out, ref, atol=1e-4, rtol=1e-4), \
        float(jnp.max(jnp.abs(out - ref)))
    print("KERNEL_OK")
</pallas_src>

<mosaic_0001>
module attributes {stable_mosaic.version = 11 : i64} {
  func.func @encoder_kernel(%arg0: memref<2x8x16xf32, #tpu.memory_space<vmem>>, %arg1: memref<16x32xf32, #tpu.memory_space<vmem>>, %arg2: memref<1x32xf32, #tpu.memory_space<vmem>>, %arg3: memref<32x128xf32, #tpu.memory_space<vmem>>, %arg4: memref<32x128xf32, #tpu.memory_space<vmem>>, %arg5: memref<1x128xf32, #tpu.memory_space<vmem>>, %arg6: memref<64x128xf32, #tpu.memory_space<vmem>>, %arg7: memref<1x128xf32, #tpu.memory_space<vmem>>, %arg8: memref<2x32xf32, #tpu.memory_space<vmem>>, %arg9: memref<8x2x128xf32, #tpu.memory_space<vmem>>) attributes {dimension_semantics = [], scalar_prefetch = 0 : i64, scratch_operands = 1 : i64, tpu.core_type = #tpu.core_type<tc>} {
    %c0 = arith.constant 0 : index
    %c0_0 = arith.constant 0 : index
    %c0_1 = arith.constant 0 : index
    %0 = vector.load %arg0[%c0, %c0_0, %c0_1] : memref<2x8x16xf32, #tpu.memory_space<vmem>>, vector<2x8x16xf32>
    %1 = vector.shape_cast %0 : vector<2x8x16xf32> to vector<16x16xf32>
    %c0_2 = arith.constant 0 : index
    %c0_3 = arith.constant 0 : index
    %2 = vector.load %arg1[%c0_2, %c0_3] : memref<16x32xf32, #tpu.memory_space<vmem>>, vector<16x32xf32>
    %cst = arith.constant dense<0.000000e+00> : vector<16x32xf32>
    %3 = tpu.matmul %1, %2, %cst {dimension_numbers = #tpu.dot_dimension_numbers<[1], [0], [0], [1], [0, 0, 1, 1], [], []>} : vector<16x16xf32>, vector<16x32xf32>, vector<16x32xf32> -> vector<16x32xf32>
    %c0_4 = arith.constant 0 : index
    %c0_5 = arith.constant 0 : index
    %4 = vector.load %arg2[%c0_4, %c0_5] : memref<1x32xf32, #tpu.memory_space<vmem>>, vector<1x32xf32>
    %5 = vector.broadcast %4 : vector<1x32xf32> to vector<16x32xf32>
    %6 = arith.addf %3, %5 : vector<16x32xf32>
    %cst_6 = arith.constant 0.000000e+00 : f32
    %7 = vector.broadcast %cst_6 : f32 to vector<16x32xf32>
    %8 = arith.cmpf ogt, %6, %7 : vector<16x32xf32>
    %cst_7 = arith.constant 2.000000e-01 : f32
    %9 = vector.broadcast %cst_7 : f32 to vector<16x32xf32>
    %10 = arith.mulf %9, %6 : vector<16x32xf32>
    %11 = arith.select %8, %6, %10 : vector<16x32xi1>, vector<16x32xf32>
    %c0_8 = arith.constant 0 : index
    %c0_9 = arith.constant 0 : index
    %12 = vector.load %arg3[%c0_8, %c0_9] : memref<32x128xf32, #tpu.memory_space<vmem>>, vector<32x128xf32>
    %cst_10 = arith.constant dense<0.000000e+00> : vector<16x128xf32>
    %13 = tpu.matmul %11, %12, %cst_10 {dimension_numbers = #tpu.dot_dimension_numbers<[1], [0], [0], [1], [0, 0, 1, 1], [], []>} : vector<16x32xf32>, vector<32x128xf32>, vector<16x128xf32> -> vector<16x128xf32>
    %c0_11 = arith.constant 0 : index
    %c0_12 = arith.constant 0 : index
    %14 = vector.load %arg5[%c0_11, %c0_12] : memref<1x128xf32, #tpu.memory_space<vmem>>, vector<1x128xf32>
    %15 = vector.broadcast %14 : vector<1x128xf32> to vector<16x128xf32>
    %16 = arith.addf %13, %15 : vector<16x128xf32>
    %17 = vector.shape_cast %16 : vector<16x128xf32> to vector<2x8x128xf32>
    %18 = vector.extract_strided_slice %17 {offsets = [0, 0, 0], sizes = [1, 8, 128], strides = [1, 1, 1]} : vector<2x8x128xf32> to vector<1x8x128xf32>
    %19 = vector.shape_cast %18 : vector<1x8x128xf32> to vector<8x128xf32>
    %c0_13 = arith.constant 0 : index
    %c0_14 = arith.constant 0 : index
    %c0_15 = arith.constant 0 : index
    %20 = vector.load %arg9[%c0_13, %c0_14, %c0_15] : memref<8x2x128xf32, #tpu.memory_space<vmem>>, vector<8x1x128xf32>
    %21 = vector.shape_cast %20 : vector<8x1x128xf32> to vector<8x128xf32>
    %22 = vector.shape_cast %19 : vector<8x128xf32> to vector<8x1x128xf32>
    tpu.vector_store %arg9[%c0_13, %c0_14, %c0_15], %22 {strides = array<i32>} : memref<8x2x128xf32, #tpu.memory_space<vmem>>, vector<8x1x128xf32>,
    %23 = vector.extract_strided_slice %17 {offsets = [1, 0, 0], sizes = [1, 8, 128], strides = [1, 1, 1]} : vector<2x8x128xf32> to vector<1x8x128xf32>
    %24 = vector.shape_cast %23 : vector<1x8x128xf32> to vector<8x128xf32>
    %c0_16 = arith.constant 0 : index
    %c1 = arith.constant 1 : index
    %c0_17 = arith.constant 0 : index
    %25 = vector.load %arg9[%c0_16, %c1, %c0_17] : memref<8x2x128xf32, #tpu.memory_space<vmem>>, vector<8x1x128xf32>
    %26 = vector.shape_cast %25 : vector<8x1x128xf32> to vector<8x128xf32>
    %27 = vector.shape_cast %24 : vector<8x128xf32> to vector<8x1x128xf32>
    tpu.vector_store %arg9[%c0_16, %c1, %c0_17], %27 {strides = array<i32>} : memref<8x2x128xf32, #tpu.memory_space<vmem>>, vector<8x1x128xf32>,
    %c0_18 = arith.constant 0 : index
    %c0_19 = arith.constant 0 : index
    %28 = vector.load %arg4[%c0_18, %c0_19] : memref<32x128xf32, #tpu.memory_space<vmem>>, vector<32x128xf32>
    %c0_20 = arith.constant 0 : index
    %c0_21 = arith.constant 0 : index
    %29 = vector.load %arg6[%c0_20, %c0_21] : memref<64x128xf32, #tpu.memory_space<vmem>>, vector<64x128xf32>
    %c0_22 = arith.constant 0 : index
    %c0_23 = arith.constant 0 : index
    %30 = vector.load %arg7[%c0_22, %c0_23] : memref<1x128xf32, #tpu.memory_space<vmem>>, vector<1x128xf32>
    %31 = tpu.iota {dimensions = array<i32: 1>} : vector<2x128xi32>
    %c64_i32 = arith.constant 64 : i32
    %32 = vector.broadcast %c64_i32 : i32 to vector<2x128xi32>
    %33 = arith.cmpi sge, %31, %32 : vector<2x128xi32>
    %c96_i32 = arith.constant 96 : i32
    %34 = vector.broadcast %c96_i32 : i32 to vector<2x128xi32>
    %35 = arith.cmpi slt, %31, %34 : vector<2x128xi32>
    %36 = arith.andi %33, %35 : vector<2x128xi1>
    %cst_24 = arith.constant 0.000000e+00 : f32
    %37 = vector.broadcast %cst_24 : f32 to vector<2x32xf32>
    %c0_i32 = arith.constant 0 : i32
    %38 = arith.index_cast %c0_i32 : i32 to index
    %c0_25 = arith.constant 0 : index
    %c0_26 = arith.constant 0 : index
    %39 = vector.load %arg9[%38, %c0_25, %c0_26] : memref<8x2x128xf32, #tpu.memory_space<vmem>>, vector<1x2x128xf32>
    %40 = vector.shape_cast %39 : vector<1x2x128xf32> to vector<2x128xf32>
    %cst_27 = arith.constant dense<0.000000e+00> : vector<2x128xf32>
    %41 = tpu.matmul %37, %28, %cst_27 {dimension_numbers = #tpu.dot_dimension_numbers<[1], [0], [0], [1], [0, 0, 1, 1], [], []>} : vector<2x32xf32>, vector<32x128xf32>, vector<2x128xf32> -> vector<2x128xf32>
    %42 = arith.addf %40, %41 : vector<2x128xf32>
    %cst_28 = arith.constant 5.000000e-01 : f32
    %43 = vector.broadcast %cst_28 : f32 to vector<2x128xf32>
    %44 = arith.mulf %43, %42 : vector<2x128xf32>
    %45 = arith.select %36, %42, %44 : vector<2x128xi1>, vector<2x128xf32>
    %46 = math.tanh %45 : vector<2x128xf32>
    %cst_29 = arith.constant 5.000000e-01 : f32
    %47 = vector.broadcast %cst_29 : f32 to vector<2x128xf32>
    %48 = arith.mulf %47, %46 : vector<2x128xf32>
    %cst_30 = arith.constant 5.000000e-01 : f32
    %49 = vector.broadcast %cst_30 : f32 to vector<2x128xf32>
    %50 = arith.addf %48, %49 : vector<2x128xf32>
    %51 = arith.select %36, %46, %50 : vector<2x128xi1>, vector<2x128xf32>
    %52 = vector.extract_strided_slice %51 {offsets = [0, 0], sizes = [2, 32], strides = [1, 1]} : vector<2x128xf32> to vector<2x32xf32>
    %53 = vector.extract_strided_slice %51 {offsets = [0, 32], sizes = [2, 32], strides = [1, 1]} : vector<2x128xf32> to vector<2x32xf32>
    %54 = vector.extract_strided_slice %51 {offsets = [0, 64], sizes = [2, 32], strides = [1, 1]} : vector<2x128xf32> to vector<2x32xf32>
    %55 = vector.extract_strided_slice %51 {offsets = [0, 96], sizes = [2, 32], strides = [1, 1]} : vector<2x128xf32> to vector<2x32xf32>
    %56 = arith.mulf %53, %37 : vector<2x32xf32>
    %57 = arith.mulf %52, %54 : vector<2x32xf32>
    %58 = arith.addf %56, %57 : vector<2x32xf32>
    %59 = math.tanh %58 : vector<2x32xf32>
    %60 = arith.mulf %55, %59 : vector<2x32xf32>
    %61 = tpu.concatenate %60, %37 in 1 : vector<2x32xf32>, vector<2x32xf32> -> vector<2x64xf32>
    %cst_31 = arith.constant dense<0.000000e+00> : vector<2x128xf32>
    %62 = tpu.matmul %61, %29, %cst_31 {dimension_numbers = #tpu.dot_dimension_numbers<[1], [0], [0], [1], [0, 0, 1, 1], [], []>} : vector<2x64xf32>, vector<64x128xf32>, vector<2x128xf32> -> vector<2x128xf32>
    %63 = vector.broadcast %30 : vector<1x128xf32> to vector<2x128xf32>
    %64 = arith.addf %62, %63 : vector<2x128xf32>
    %cst_32 = arith.constant 5.000000e-01 : f32
    %65 = vector.broadcast %cst_32 : f32 to vector<2x128xf32>
    %66 = arith.mulf %65, %64 : vector<2x128xf32>
    %67 = arith.select %36, %64, %66 : vector<2x128xi1>, vector<2x128xf32>
    %68 = math.tanh %67 : vector<2x128xf32>
    %cst_33 = arith.constant 5.000000e-01 : f32
    %69 = vector.broadcast %cst_33 : f32 to vector<2x128xf32>
    %70 = arith.mulf %69, %68 : vector<2x128xf32>
    %cst_34 = arith.constant 5.000000e-01 : f32
    %71 = vector.broadcast %cst_34 : f32 to vector<2x128xf32>
    %72 = arith.addf %70, %71 : vector<2x128xf32>
    %73 = arith.select %36, %68, %72 : vector<2x128xi1>, vector<2x128xf32>
    %74 = vector.extract_strided_slice %73 {offsets = [0, 0], sizes = [2, 32], strides = [1, 1]} : vector<2x128xf32> to vector<2x32xf32>
    %75 = vector.extract_strided_slice %73 {offsets = [0, 32], sizes = [2, 32], strides = [1, 1]} : vector<2x128xf32> to vector<2x32xf32>
    %76 = vector.extract_strided_slice %73 {offsets = [0, 64], sizes = [2, 32], strides = [1, 1]} : vector<2x128xf32> to vector<2x32xf32>
    %77 = vector.extract_strided_slice %73 {offsets = [0, 96], sizes = [2, 32], strides = [1, 1]} : vector<2x128xf32> to vector<2x32xf32>
    %78 = arith.mulf %75, %37 : vector<2x32xf32>
    %79 = arith.mulf %74, %76 : vector<2x32xf32>
    %80 = arith.addf %78, %79 : vector<2x32xf32>
    %81 = math.tanh %80 : vector<2x32xf32>
    %82 = arith.mulf %77, %81 : vector<2x32xf32>
    %c1_i32 = arith.constant 1 : i32
    %83 = arith.index_cast %c1_i32 : i32 to index
    %c0_35 = arith.constant 0 : index
    %c0_36 = arith.constant 0 : index
    %84 = vector.load %arg9[%83, %c0_35, %c0_36] : memref<8x2x128xf32, #tpu.memory_space<vmem>>, vector<1x2x128xf32>
    %85 = vector.shape_cast %84 : vector<1x2x128xf32> to vector<2x128xf32>
    %cst_37 = arith.constant dense<0.000000e+00> : vector<2x128xf32>
    %86 = tpu.matmul %60, %28, %cst_37 {dimension_numbers = #tpu.dot_dimension_numbers<[1], [0], [0], [1], [0, 0, 1, 1], [], []>} : vector<2x32xf32>, vector<32x128xf32>, vector<2x128xf32> -> vector<2x128xf32>
    %87 = arith.addf %85, %86 : vector<2x128xf32>
    %cst_38 = arith.constant 5.000000e-01 : f32
    %88 = vector.broadcast %cst_38 : f32 to vector<2x128xf32>
    %89 = arith.mulf %88, %87 : vector<2x128xf32>
    %90 = arith.select %36, %87, %89 : vector<2x128xi1>, vector<2x128xf32>
    %91 = math.tanh %90 : vector<2x128xf32>
    %cst_39 = arith.constant 5.000000e-01 : f32
    %92 = vector.broadcast %cst_39 : f32 to vector<2x128xf32>
    %93 = arith.mulf %92, %91 : vector<2x128xf32>
    %cst_40 = arith.constant 5.000000e-01 : f32
    %94 = vector.broadcast %cst_40 : f32 to vector<2x128xf32>
    %95 = arith.addf %93, %94 : vector<2x128xf32>
    %96 = arith.select %36, %91, %95 : vector<2x128xi1>, vector<2x128xf32>
    %97 = vector.extract_strided_slice %96 {offsets = [0, 0], sizes = [2, 32], strides = [1, 1]} : vector<2x128xf32> to vector<2x32xf32>
    %98 = vector.extract_strided_slice %96 {offsets = [0, 32], sizes = [2, 32], strides = [1, 1]} : vector<2x128xf32> to vector<2x32xf32>
    %99 = vector.extract_strided_slice %96 {offsets = [0, 64], sizes = [2, 32], strides = [1, 1]} : vector<2x128xf32> to vector<2x32xf32>
    %100 = vector.extract_strided_slice %96 {offsets = [0, 96], sizes = [2, 32], strides = [1, 1]} : vector<2x128xf32> to vector<2x32xf32>
    %101 = arith.mulf %98, %58 : vector<2x32xf32>
    %102 = arith.mulf %97, %99 : vector<2x32xf32>
    %103 = arith.addf %101, %102 : vector<2x32xf32>
    %104 = math.tanh %103 : vector<2x32xf32>
    %105 = arith.mulf %100, %104 : vector<2x32xf32>
    %106 = tpu.concatenate %105, %82 in 1 : vector<2x32xf32>, vector<2x32xf32> -> vector<2x64xf32>
    %cst_41 = arith.constant dense<0.000000e+00> : vector<2x128xf32>
    %107 = tpu.matmul %106, %29, %cst_41 {dimension_numbers = #tpu.dot_dimension_numbers<[1], [0], [0], [1], [0, 0, 1, 1], [], []>} : vector<2x64xf32>, vector<64x128xf32>, vector<2x128xf32> -> vector<2x128xf32>
    %108 = vector.broadcast %30 : vector<1x128xf32> to vector<2x128xf32>
    %109 = arith.addf %107, %108 : vector<2x128xf32>
    %cst_42 = arith.constant 5.000000e-01 : f32
    %110 = vector.broadcast %cst_42 : f32 to vector<2x128xf32>
    %111 = arith.mulf %110, %109 : vector<2x128xf32>
    %112 = arith.select %36, %109, %111 : vector<2x128xi1>, vector<2x128xf32>
    %113 = math.tanh %112 : vector<2x128xf32>
    %cst_43 = arith.constant 5.000000e-01 : f32
    %114 = vector.broadcast %cst_43 : f32 to vector<2x128xf32>
    %115 = arith.mulf %114, %113 : vector<2x128xf32>
    %cst_44 = arith.constant 5.000000e-01 : f32
    %116 = vector.broadcast %cst_44 : f32 to vector<2x128xf32>
    %117 = arith.addf %115, %116 : vector<2x128xf32>
    %118 = arith.select %36, %113, %117 : vector<2x128xi1>, vector<2x128xf32>
    %119 = vector.extract_strided_slice %118 {offsets = [0, 0], sizes = [2, 32], strides = [1, 1]} : vector<2x128xf32> to vector<2x32xf32>
    %120 = vector.extract_strided_slice %118 {offsets = [0, 32], sizes = [2, 32], strides = [1, 1]} : vector<2x128xf32> to vector<2x32xf32>
    %121 = vector.extract_strided_slice %118 {offsets = [0, 64], sizes = [2, 32], strides = [1, 1]} : vector<2x128xf32> to vector<2x32xf32>
    %122 = vector.extract_strided_slice %118 {offsets = [0, 96], sizes = [2, 32], strides = [1, 1]} : vector<2x128xf32> to vector<2x32xf32>
    %123 = arith.mulf %120, %80 : vector<2x32xf32>
    %124 = arith.mulf %119, %121 : vector<2x32xf32>
    %125 = arith.addf %123, %124 : vector<2x32xf32>
    %126 = math.tanh %125 : vector<2x32xf32>
    %127 = arith.mulf %122, %126 : vector<2x32xf32>
    %c2_i32 = arith.constant 2 : i32
    %128 = arith.index_cast %c2_i32 : i32 to index
    %c0_45 = arith.constant 0 : index
    %c0_46 = arith.constant 0 : index
    %129 = vector.load %arg9[%128, %c0_45, %c0_46] : memref<8x2x128xf32, #tpu.memory_space<vmem>>, vector<1x2x128xf32>
    %130 = vector.shape_cast %129 : vector<1x2x128xf32> to vector<2x128xf32>
    %cst_47 = arith.constant dense<0.000000e+00> : vector<2x128xf32>
    %131 = tpu.matmul %105, %28, %cst_47 {dimension_numbers = #tpu.dot_dimension_numbers<[1], [0], [0], [1], [0, 0, 1, 1], [], []>} : vector<2x32xf32>, vector<32x128xf32>, vector<2x128xf32> -> vector<2x128xf32>
    %132 = arith.addf %130, %131 : vector<2x128xf32>
    %cst_48 = arith.constant 5.000000e-01 : f32
    %133 = vector.broadcast %cst_48 : f32 to vector<2x128xf32>
    %134 = arith.mulf %133, %132 : vector<2x128xf32>
    %135 = arith.select %36, %132, %134 : vector<2x128xi1>, vector<2x128xf32>
    %136 = math.tanh %135 : vector<2x128xf32>
    %cst_49 = arith.constant 5.000000e-01 : f32
    %137 = vector.broadcast %cst_49 : f32 to vector<2x128xf32>
    %138 = arith.mulf %137, %136 : vector<2x128xf32>
    %cst_50 = arith.constant 5.000000e-01 : f32
    %139 = vector.broadcast %cst_50 : f32 to vector<2x128xf32>
    %140 = arith.addf %138, %139 : vector<2x128xf32>
    %141 = arith.select %36, %136, %140 : vector<2x128xi1>, vector<2x128xf32>
    %142 = vector.extract_strided_slice %141 {offsets = [0, 0], sizes = [2, 32], strides = [1, 1]} : vector<2x128xf32> to vector<2x32xf32>
    %143 = vector.extract_strided_slice %141 {offsets = [0, 32], sizes = [2, 32], strides = [1, 1]} : vector<2x128xf32> to vector<2x32xf32>
    %144 = vector.extract_strided_slice %141 {offsets = [0, 64], sizes = [2, 32], strides = [1, 1]} : vector<2x128xf32> to vector<2x32xf32>
    %145 = vector.extract_strided_slice %141 {offsets = [0, 96], sizes = [2, 32], strides = [1, 1]} : vector<2x128xf32> to vector<2x32xf32>
    %146 = arith.mulf %143, %103 : vector<2x32xf32>
    %147 = arith.mulf %142, %144 : vector<2x32xf32>
    %148 = arith.addf %146, %147 : vector<2x32xf32>
    %149 = math.tanh %148 : vector<2x32xf32>
    %150 = arith.mulf %145, %149 : vector<2x32xf32>
    %151 = tpu.concatenate %150, %127 in 1 : vector<2x32xf32>, vector<2x32xf32> -> vector<2x64xf32>
    %cst_51 = arith.constant dense<0.000000e+00> : vector<2x128xf32>
    %152 = tpu.matmul %151, %29, %cst_51 {dimension_numbers = #tpu.dot_dimension_numbers<[1], [0], [0], [1], [0, 0, 1, 1], [], []>} : vector<2x64xf32>, vector<64x128xf32>, vector<2x128xf32> -> vector<2x128xf32>
    %153 = vector.broadcast %30 : vector<1x128xf32> to vector<2x128xf32>
    %154 = arith.addf %152, %153 : vector<2x128xf32>
    %cst_52 = arith.constant 5.000000e-01 : f32
    %155 = vector.broadcast %cst_52 : f32 to vector<2x128xf32>
    %156 = arith.mulf %155, %154 : vector<2x128xf32>
    %157 = arith.select %36, %154, %156 : vector<2x128xi1>, vector<2x128xf32>
    %158 = math.tanh %157 : vector<2x128xf32>
    %cst_53 = arith.constant 5.000000e-01 : f32
    %159 = vector.broadcast %cst_53 : f32 to vector<2x128xf32>
    %160 = arith.mulf %159, %158 : vector<2x128xf32>
    %cst_54 = arith.constant 5.000000e-01 : f32
    %161 = vector.broadcast %cst_54 : f32 to vector<2x128xf32>
    %162 = arith.addf %160, %161 : vector<2x128xf32>
    %163 = arith.select %36, %158, %162 : vector<2x128xi1>, vector<2x128xf32>
    %164 = vector.extract_strided_slice %163 {offsets = [0, 0], sizes = [2, 32], strides = [1, 1]} : vector<2x128xf32> to vector<2x32xf32>
    %165 = vector.extract_strided_slice %163 {offsets = [0, 32], sizes = [2, 32], strides = [1, 1]} : vector<2x128xf32> to vector<2x32xf32>
    %166 = vector.extract_strided_slice %163 {offsets = [0, 64], sizes = [2, 32], strides = [1, 1]} : vector<2x128xf32> to vector<2x32xf32>
    %167 = vector.extract_strided_slice %163 {offsets = [0, 96], sizes = [2, 32], strides = [1, 1]} : vector<2x128xf32> to vector<2x32xf32>
    %168 = arith.mulf %165, %125 : vector<2x32xf32>
    %169 = arith.mulf %164, %166 : vector<2x32xf32>
    %170 = arith.addf %168, %169 : vector<2x32xf32>
    %171 = math.tanh %170 : vector<2x32xf32>
    %172 = arith.mulf %167, %171 : vector<2x32xf32>
    %c3_i32 = arith.constant 3 : i32
    %173 = arith.index_cast %c3_i32 : i32 to index
    %c0_55 = arith.constant 0 : index
    %c0_56 = arith.constant 0 : index
    %174 = vector.load %arg9[%173, %c0_55, %c0_56] : memref<8x2x128xf32, #tpu.memory_space<vmem>>, vector<1x2x128xf32>
    %175 = vector.shape_cast %174 : vector<1x2x128xf32> to vector<2x128xf32>
    %cst_57 = arith.constant dense<0.000000e+00> : vector<2x128xf32>
    %176 = tpu.matmul %150, %28, %cst_57 {dimension_numbers = #tpu.dot_dimension_numbers<[1], [0], [0], [1], [0, 0, 1, 1], [], []>} : vector<2x32xf32>, vector<32x128xf32>, vector<2x128xf32> -> vector<2x128xf32>
    %177 = arith.addf %175, %176 : vector<2x128xf32>
    %cst_58 = arith.constant 5.000000e-01 : f32
    %178 = vector.broadcast %cst_58 : f32 to vector<2x128xf32>
    %179 = arith.mulf %178, %177 : vector<2x128xf32>
    %180 = arith.select %36, %177, %179 : vector<2x128xi1>, vector<2x128xf32>
    %181 = math.tanh %180 : vector<2x128xf32>
    %cst_59 = arith.constant 5.000000e-01 : f32
    %182 = vector.broadcast %cst_59 : f32 to vector<2x128xf32>
    %183 = arith.mulf %182, %181 : vector<2x128xf32>
    %cst_60 = arith.constant 5.000000e-01 : f32
    %184 = vector.broadcast %cst_60 : f32 to vector<2x128xf32>
    %185 = arith.addf %183, %184 : vector<2x128xf32>
    %186 = arith.select %36, %181, %185 : vector<2x128xi1>, vector<2x128xf32>
    %187 = vector.extract_strided_slice %186 {offsets = [0, 0], sizes = [2, 32], strides = [1, 1]} : vector<2x128xf32> to vector<2x32xf32>
    %188 = vector.extract_strided_slice %186 {offsets = [0, 32], sizes = [2, 32], strides = [1, 1]} : vector<2x128xf32> to vector<2x32xf32>
    %189 = vector.extract_strided_slice %186 {offsets = [0, 64], sizes = [2, 32], strides = [1, 1]} : vector<2x128xf32> to vector<2x32xf32>
    %190 = vector.extract_strided_slice %186 {offsets = [0, 96], sizes = [2, 32], strides = [1, 1]} : vector<2x128xf32> to vector<2x32xf32>
    %191 = arith.mulf %188, %148 : vector<2x32xf32>
    %192 = arith.mulf %187, %189 : vector<2x32xf32>
    %193 = arith.addf %191, %192 : vector<2x32xf32>
    %194 = math.tanh %193 : vector<2x32xf32>
    %195 = arith.mulf %190, %194 : vector<2x32xf32>
    %196 = tpu.concatenate %195, %172 in 1 : vector<2x32xf32>, vector<2x32xf32> -> vector<2x64xf32>
    %cst_61 = arith.constant dense<0.000000e+00> : vector<2x128xf32>
    %197 = tpu.matmul %196, %29, %cst_61 {dimension_numbers = #tpu.dot_dimension_numbers<[1], [0], [0], [1], [0, 0, 1, 1], [], []>} : vector<2x64xf32>, vector<64x128xf32>, vector<2x128xf32> -> vector<2x128xf32>
    %198 = vector.broadcast %30 : vector<1x128xf32> to vector<2x128xf32>
    %199 = arith.addf %197, %198 : vector<2x128xf32>
    %cst_62 = arith.constant 5.000000e-01 : f32
    %200 = vector.broadcast %cst_62 : f32 to vector<2x128xf32>
    %201 = arith.mulf %200, %199 : vector<2x128xf32>
    %202 = arith.select %36, %199, %201 : vector<2x128xi1>, vector<2x128xf32>
    %203 = math.tanh %202 : vector<2x128xf32>
    %cst_63 = arith.constant 5.000000e-01 : f32
    %204 = vector.broadcast %cst_63 : f32 to vector<2x128xf32>
    %205 = arith.mulf %204, %203 : vector<2x128xf32>
    %cst_64 = arith.constant 5.000000e-01 : f32
    %206 = vector.broadcast %cst_64 : f32 to vector<2x128xf32>
    %207 = arith.addf %205, %206 : vector<2x128xf32>
    %208 = arith.select %36, %203, %207 : vector<2x128xi1>, vector<2x128xf32>
    %209 = vector.extract_strided_slice %208 {offsets = [0, 0], sizes = [2, 32], strides = [1, 1]} : vector<2x128xf32> to vector<2x32xf32>
    %210 = vector.extract_strided_slice %208 {offsets = [0, 32], sizes = [2, 32], strides = [1, 1]} : vector<2x128xf32> to vector<2x32xf32>
    %211 = vector.extract_strided_slice %208 {offsets = [0, 64], sizes = [2, 32], strides = [1, 1]} : vector<2x128xf32> to vector<2x32xf32>
    %212 = vector.extract_strided_slice %208 {offsets = [0, 96], sizes = [2, 32], strides = [1, 1]} : vector<2x128xf32> to vector<2x32xf32>
    %213 = arith.mulf %210, %170 : vector<2x32xf32>
    %214 = arith.mulf %209, %211 : vector<2x32xf32>
    %215 = arith.addf %213, %214 : vector<2x32xf32>
    %216 = math.tanh %215 : vector<2x32xf32>
    %217 = arith.mulf %212, %216 : vector<2x32xf32>
    %c4_i32 = arith.constant 4 : i32
    %218 = arith.index_cast %c4_i32 : i32 to index
    %c0_65 = arith.constant 0 : index
    %c0_66 = arith.constant 0 : index
    %219 = vector.load %arg9[%218, %c0_65, %c0_66] : memref<8x2x128xf32, #tpu.memory_space<vmem>>, vector<1x2x128xf32>
    %220 = vector.shape_cast %219 : vector<1x2x128xf32> to vector<2x128xf32>
    %cst_67 = arith.constant dense<0.000000e+00> : vector<2x128xf32>
    %221 = tpu.matmul %195, %28, %cst_67 {dimension_numbers = #tpu.dot_dimension_numbers<[1], [0], [0], [1], [0, 0, 1, 1], [], []>} : vector<2x32xf32>, vector<32x128xf32>, vector<2x128xf32> -> vector<2x128xf32>
    %222 = arith.addf %220, %221 : vector<2x128xf32>
    %cst_68 = arith.constant 5.000000e-01 : f32
    %223 = vector.broadcast %cst_68 : f32 to vector<2x128xf32>
    %224 = arith.mulf %223, %222 : vector<2x128xf32>
    %225 = arith.select %36, %222, %224 : vector<2x128xi1>, vector<2x128xf32>
    %226 = math.tanh %225 : vector<2x128xf32>
    %cst_69 = arith.constant 5.000000e-01 : f32
    %227 = vector.broadcast %cst_69 : f32 to vector<2x128xf32>
    %228 = arith.mulf %227, %226 : vector<2x128xf32>
    %cst_70 = arith.constant 5.000000e-01 : f32
    %229 = vector.broadcast %cst_70 : f32 to vector<2x128xf32>
    %230 = arith.addf %228, %229 : vector<2x128xf32>
    %231 = arith.select %36, %226, %230 : vector<2x128xi1>, vector<2x128xf32>
    %232 = vector.extract_strided_slice %231 {offsets = [0, 0], sizes = [2, 32], strides = [1, 1]} : vector<2x128xf32> to vector<2x32xf32>
    %233 = vector.extract_strided_slice %231 {offsets = [0, 32], sizes = [2, 32], strides = [1, 1]} : vector<2x128xf32> to vector<2x32xf32>
    %234 = vector.extract_strided_slice %231 {offsets = [0, 64], sizes = [2, 32], strides = [1, 1]} : vector<2x128xf32> to vector<2x32xf32>
    %235 = vector.extract_strided_slice %231 {offsets = [0, 96], sizes = [2, 32], strides = [1, 1]} : vector<2x128xf32> to vector<2x32xf32>
    %236 = arith.mulf %233, %193 : vector<2x32xf32>
    %237 = arith.mulf %232, %234 : vector<2x32xf32>
    %238 = arith.addf %236, %237 : vector<2x32xf32>
    %239 = math.tanh %238 : vector<2x32xf32>
    %240 = arith.mulf %235, %239 : vector<2x32xf32>
    %241 = tpu.concatenate %240, %217 in 1 : vector<2x32xf32>, vector<2x32xf32> -> vector<2x64xf32>
    %cst_71 = arith.constant dense<0.000000e+00> : vector<2x128xf32>
    %242 = tpu.matmul %241, %29, %cst_71 {dimension_numbers = #tpu.dot_dimension_numbers<[1], [0], [0], [1], [0, 0, 1, 1], [], []>} : vector<2x64xf32>, vector<64x128xf32>, vector<2x128xf32> -> vector<2x128xf32>
    %243 = vector.broadcast %30 : vector<1x128xf32> to vector<2x128xf32>
    %244 = arith.addf %242, %243 : vector<2x128xf32>
    %cst_72 = arith.constant 5.000000e-01 : f32
    %245 = vector.broadcast %cst_72 : f32 to vector<2x128xf32>
    %246 = arith.mulf %245, %244 : vector<2x128xf32>
    %247 = arith.select %36, %244, %246 : vector<2x128xi1>, vector<2x128xf32>
    %248 = math.tanh %247 : vector<2x128xf32>
    %cst_73 = arith.constant 5.000000e-01 : f32
    %249 = vector.broadcast %cst_73 : f32 to vector<2x128xf32>
    %250 = arith.mulf %249, %248 : vector<2x128xf32>
    %cst_74 = arith.constant 5.000000e-01 : f32
    %251 = vector.broadcast %cst_74 : f32 to vector<2x128xf32>
    %252 = arith.addf %250, %251 : vector<2x128xf32>
    %253 = arith.select %36, %248, %252 : vector<2x128xi1>, vector<2x128xf32>
    %254 = vector.extract_strided_slice %253 {offsets = [0, 0], sizes = [2, 32], strides = [1, 1]} : vector<2x128xf32> to vector<2x32xf32>
    %255 = vector.extract_strided_slice %253 {offsets = [0, 32], sizes = [2, 32], strides = [1, 1]} : vector<2x128xf32> to vector<2x32xf32>
    %256 = vector.extract_strided_slice %253 {offsets = [0, 64], sizes = [2, 32], strides = [1, 1]} : vector<2x128xf32> to vector<2x32xf32>
    %257 = vector.extract_strided_slice %253 {offsets = [0, 96], sizes = [2, 32], strides = [1, 1]} : vector<2x128xf32> to vector<2x32xf32>
    %258 = arith.mulf %255, %215 : vector<2x32xf32>
    %259 = arith.mulf %254, %256 : vector<2x32xf32>
    %260 = arith.addf %258, %259 : vector<2x32xf32>
    %261 = math.tanh %260 : vector<2x32xf32>
    %262 = arith.mulf %257, %261 : vector<2x32xf32>
    %c5_i32 = arith.constant 5 : i32
    %263 = arith.index_cast %c5_i32 : i32 to index
    %c0_75 = arith.constant 0 : index
    %c0_76 = arith.constant 0 : index
    %264 = vector.load %arg9[%263, %c0_75, %c0_76] : memref<8x2x128xf32, #tpu.memory_space<vmem>>, vector<1x2x128xf32>
    %265 = vector.shape_cast %264 : vector<1x2x128xf32> to vector<2x128xf32>
    %cst_77 = arith.constant dense<0.000000e+00> : vector<2x128xf32>
    %266 = tpu.matmul %240, %28, %cst_77 {dimension_numbers = #tpu.dot_dimension_numbers<[1], [0], [0], [1], [0, 0, 1, 1], [], []>} : vector<2x32xf32>, vector<32x128xf32>, vector<2x128xf32> -> vector<2x128xf32>
    %267 = arith.addf %265, %266 : vector<2x128xf32>
    %cst_78 = arith.constant 5.000000e-01 : f32
    %268 = vector.broadcast %cst_78 : f32 to vector<2x128xf32>
    %269 = arith.mulf %268, %267 : vector<2x128xf32>
    %270 = arith.select %36, %267, %269 : vector<2x128xi1>, vector<2x128xf32>
    %271 = math.tanh %270 : vector<2x128xf32>
    %cst_79 = arith.constant 5.000000e-01 : f32
    %272 = vector.broadcast %cst_79 : f32 to vector<2x128xf32>
    %273 = arith.mulf %272, %271 : vector<2x128xf32>
    %cst_80 = arith.constant 5.000000e-01 : f32
    %274 = vector.broadcast %cst_80 : f32 to vector<2x128xf32>
    %275 = arith.addf %273, %274 : vector<2x128xf32>
    %276 = arith.select %36, %271, %275 : vector<2x128xi1>, vector<2x128xf32>
    %277 = vector.extract_strided_slice %276 {offsets = [0, 0], sizes = [2, 32], strides = [1, 1]} : vector<2x128xf32> to vector<2x32xf32>
    %278 = vector.extract_strided_slice %276 {offsets = [0, 32], sizes = [2, 32], strides = [1, 1]} : vector<2x128xf32> to vector<2x32xf32>
    %279 = vector.extract_strided_slice %276 {offsets = [0, 64], sizes = [2, 32], strides = [1, 1]} : vector<2x128xf32> to vector<2x32xf32>
    %280 = vector.extract_strided_slice %276 {offsets = [0, 96], sizes = [2, 32], strides = [1, 1]} : vector<2x128xf32> to vector<2x32xf32>
    %281 = arith.mulf %278, %238 : vector<2x32xf32>
    %282 = arith.mulf %277, %279 : vector<2x32xf32>
    %283 = arith.addf %281, %282 : vector<2x32xf32>
    %284 = math.tanh %283 : vector<2x32xf32>
    %285 = arith.mulf %280, %284 : vector<2x32xf32>
    %286 = tpu.concatenate %285, %262 in 1 : vector<2x32xf32>, vector<2x32xf32> -> vector<2x64xf32>
    %cst_81 = arith.constant dense<0.000000e+00> : vector<2x128xf32>
    %287 = tpu.matmul %286, %29, %cst_81 {dimension_numbers = #tpu.dot_dimension_numbers<[1], [0], [0], [1], [0, 0, 1, 1], [], []>} : vector<2x64xf32>, vector<64x128xf32>, vector<2x128xf32> -> vector<2x128xf32>
    %288 = vector.broadcast %30 : vector<1x128xf32> to vector<2x128xf32>
    %289 = arith.addf %287, %288 : vector<2x128xf32>
    %cst_82 = arith.constant 5.000000e-01 : f32
    %290 = vector.broadcast %cst_82 : f32 to vector<2x128xf32>
    %291 = arith.mulf %290, %289 : vector<2x128xf32>
    %292 = arith.select %36, %289, %291 : vector<2x128xi1>, vector<2x128xf32>
    %293 = math.tanh %292 : vector<2x128xf32>
    %cst_83 = arith.constant 5.000000e-01 : f32
    %294 = vector.broadcast %cst_83 : f32 to vector<2x128xf32>
    %295 = arith.mulf %294, %293 : vector<2x128xf32>
    %cst_84 = arith.constant 5.000000e-01 : f32
    %296 = vector.broadcast %cst_84 : f32 to vector<2x128xf32>
    %297 = arith.addf %295, %296 : vector<2x128xf32>
    %298 = arith.select %36, %293, %297 : vector<2x128xi1>, vector<2x128xf32>
    %299 = vector.extract_strided_slice %298 {offsets = [0, 0], sizes = [2, 32], strides = [1, 1]} : vector<2x128xf32> to vector<2x32xf32>
    %300 = vector.extract_strided_slice %298 {offsets = [0, 32], sizes = [2, 32], strides = [1, 1]} : vector<2x128xf32> to vector<2x32xf32>
    %301 = vector.extract_strided_slice %298 {offsets = [0, 64], sizes = [2, 32], strides = [1, 1]} : vector<2x128xf32> to vector<2x32xf32>
    %302 = vector.extract_strided_slice %298 {offsets = [0, 96], sizes = [2, 32], strides = [1, 1]} : vector<2x128xf32> to vector<2x32xf32>
    %303 = arith.mulf %300, %260 : vector<2x32xf32>
    %304 = arith.mulf %299, %301 : vector<2x32xf32>
    %305 = arith.addf %303, %304 : vector<2x32xf32>
    %306 = math.tanh %305 : vector<2x32xf32>
    %307 = arith.mulf %302, %306 : vector<2x32xf32>
    %c6_i32 = arith.constant 6 : i32
    %308 = arith.index_cast %c6_i32 : i32 to index
    %c0_85 = arith.constant 0 : index
    %c0_86 = arith.constant 0 : index
    %309 = vector.load %arg9[%308, %c0_85, %c0_86] : memref<8x2x128xf32, #tpu.memory_space<vmem>>, vector<1x2x128xf32>
    %310 = vector.shape_cast %309 : vector<1x2x128xf32> to vector<2x128xf32>
    %cst_87 = arith.constant dense<0.000000e+00> : vector<2x128xf32>
    %311 = tpu.matmul %285, %28, %cst_87 {dimension_numbers = #tpu.dot_dimension_numbers<[1], [0], [0], [1], [0, 0, 1, 1], [], []>} : vector<2x32xf32>, vector<32x128xf32>, vector<2x128xf32> -> vector<2x128xf32>
    %312 = arith.addf %310, %311 : vector<2x128xf32>
    %cst_88 = arith.constant 5.000000e-01 : f32
    %313 = vector.broadcast %cst_88 : f32 to vector<2x128xf32>
    %314 = arith.mulf %313, %312 : vector<2x128xf32>
    %315 = arith.select %36, %312, %314 : vector<2x128xi1>, vector<2x128xf32>
    %316 = math.tanh %315 : vector<2x128xf32>
    %cst_89 = arith.constant 5.000000e-01 : f32
    %317 = vector.broadcast %cst_89 : f32 to vector<2x128xf32>
    %318 = arith.mulf %317, %316 : vector<2x128xf32>
    %cst_90 = arith.constant 5.000000e-01 : f32
    %319 = vector.broadcast %cst_90 : f32 to vector<2x128xf32>
    %320 = arith.addf %318, %319 : vector<2x128xf32>
    %321 = arith.select %36, %316, %320 : vector<2x128xi1>, vector<2x128xf32>
    %322 = vector.extract_strided_slice %321 {offsets = [0, 0], sizes = [2, 32], strides = [1, 1]} : vector<2x128xf32> to vector<2x32xf32>
    %323 = vector.extract_strided_slice %321 {offsets = [0, 32], sizes = [2, 32], strides = [1, 1]} : vector<2x128xf32> to vector<2x32xf32>
    %324 = vector.extract_strided_slice %321 {offsets = [0, 64], sizes = [2, 32], strides = [1, 1]} : vector<2x128xf32> to vector<2x32xf32>
    %325 = vector.extract_strided_slice %321 {offsets = [0, 96], sizes = [2, 32], strides = [1, 1]} : vector<2x128xf32> to vector<2x32xf32>
    %326 = arith.mulf %323, %283 : vector<2x32xf32>
    %327 = arith.mulf %322, %324 : vector<2x32xf32>
    %328 = arith.addf %326, %327 : vector<2x32xf32>
    %329 = math.tanh %328 : vector<2x32xf32>
    %330 = arith.mulf %325, %329 : vector<2x32xf32>
    %331 = tpu.concatenate %330, %307 in 1 : vector<2x32xf32>, vector<2x32xf32> -> vector<2x64xf32>
    %cst_91 = arith.constant dense<0.000000e+00> : vector<2x128xf32>
    %332 = tpu.matmul %331, %29, %cst_91 {dimension_numbers = #tpu.dot_dimension_numbers<[1], [0], [0], [1], [0, 0, 1, 1], [], []>} : vector<2x64xf32>, vector<64x128xf32>, vector<2x128xf32> -> vector<2x128xf32>
    %333 = vector.broadcast %30 : vector<1x128xf32> to vector<2x128xf32>
    %334 = arith.addf %332, %333 : vector<2x128xf32>
    %cst_92 = arith.constant 5.000000e-01 : f32
    %335 = vector.broadcast %cst_92 : f32 to vector<2x128xf32>
    %336 = arith.mulf %335, %334 : vector<2x128xf32>
    %337 = arith.select %36, %334, %336 : vector<2x128xi1>, vector<2x128xf32>
    %338 = math.tanh %337 : vector<2x128xf32>
    %cst_93 = arith.constant 5.000000e-01 : f32
    %339 = vector.broadcast %cst_93 : f32 to vector<2x128xf32>
    %340 = arith.mulf %339, %338 : vector<2x128xf32>
    %cst_94 = arith.constant 5.000000e-01 : f32
    %341 = vector.broadcast %cst_94 : f32 to vector<2x128xf32>
    %342 = arith.addf %340, %341 : vector<2x128xf32>
    %343 = arith.select %36, %338, %342 : vector<2x128xi1>, vector<2x128xf32>
    %344 = vector.extract_strided_slice %343 {offsets = [0, 0], sizes = [2, 32], strides = [1, 1]} : vector<2x128xf32> to vector<2x32xf32>
    %345 = vector.extract_strided_slice %343 {offsets = [0, 32], sizes = [2, 32], strides = [1, 1]} : vector<2x128xf32> to vector<2x32xf32>
    %346 = vector.extract_strided_slice %343 {offsets = [0, 64], sizes = [2, 32], strides = [1, 1]} : vector<2x128xf32> to vector<2x32xf32>
    %347 = vector.extract_strided_slice %343 {offsets = [0, 96], sizes = [2, 32], strides = [1, 1]} : vector<2x128xf32> to vector<2x32xf32>
    %348 = arith.mulf %345, %305 : vector<2x32xf32>
    %349 = arith.mulf %344, %346 : vector<2x32xf32>
    %350 = arith.addf %348, %349 : vector<2x32xf32>
    %351 = math.tanh %350 : vector<2x32xf32>
    %352 = arith.mulf %347, %351 : vector<2x32xf32>
    %c7_i32 = arith.constant 7 : i32
    %353 = arith.index_cast %c7_i32 : i32 to index
    %c0_95 = arith.constant 0 : index
    %c0_96 = arith.constant 0 : index
    %354 = vector.load %arg9[%353, %c0_95, %c0_96] : memref<8x2x128xf32, #tpu.memory_space<vmem>>, vector<1x2x128xf32>
    %355 = vector.shape_cast %354 : vector<1x2x128xf32> to vector<2x128xf32>
    %cst_97 = arith.constant dense<0.000000e+00> : vector<2x128xf32>
    %356 = tpu.matmul %330, %28, %cst_97 {dimension_numbers = #tpu.dot_dimension_numbers<[1], [0], [0], [1], [0, 0, 1, 1], [], []>} : vector<2x32xf32>, vector<32x128xf32>, vector<2x128xf32> -> vector<2x128xf32>
    %357 = arith.addf %355, %356 : vector<2x128xf32>
    %cst_98 = arith.constant 5.000000e-01 : f32
    %358 = vector.broadcast %cst_98 : f32 to vector<2x128xf32>
    %359 = arith.mulf %358, %357 : vector<2x128xf32>
    %360 = arith.select %36, %357, %359 : vector<2x128xi1>, vector<2x128xf32>
    %361 = math.tanh %360 : vector<2x128xf32>
    %cst_99 = arith.constant 5.000000e-01 : f32
    %362 = vector.broadcast %cst_99 : f32 to vector<2x128xf32>
    %363 = arith.mulf %362, %361 : vector<2x128xf32>
    %cst_100 = arith.constant 5.000000e-01 : f32
    %364 = vector.broadcast %cst_100 : f32 to vector<2x128xf32>
    %365 = arith.addf %363, %364 : vector<2x128xf32>
    %366 = arith.select %36, %361, %365 : vector<2x128xi1>, vector<2x128xf32>
    %367 = vector.extract_strided_slice %366 {offsets = [0, 0], sizes = [2, 32], strides = [1, 1]} : vector<2x128xf32> to vector<2x32xf32>
    %368 = vector.extract_strided_slice %366 {offsets = [0, 32], sizes = [2, 32], strides = [1, 1]} : vector<2x128xf32> to vector<2x32xf32>
    %369 = vector.extract_strided_slice %366 {offsets = [0, 64], sizes = [2, 32], strides = [1, 1]} : vector<2x128xf32> to vector<2x32xf32>
    %370 = vector.extract_strided_slice %366 {offsets = [0, 96], sizes = [2, 32], strides = [1, 1]} : vector<2x128xf32> to vector<2x32xf32>
    %371 = arith.mulf %368, %328 : vector<2x32xf32>
    %372 = arith.mulf %367, %369 : vector<2x32xf32>
    %373 = arith.addf %371, %372 : vector<2x32xf32>
    %374 = math.tanh %373 : vector<2x32xf32>
    %375 = arith.mulf %370, %374 : vector<2x32xf32>
    %376 = tpu.concatenate %375, %352 in 1 : vector<2x32xf32>, vector<2x32xf32> -> vector<2x64xf32>
    %cst_101 = arith.constant dense<0.000000e+00> : vector<2x128xf32>
    %377 = tpu.matmul %376, %29, %cst_101 {dimension_numbers = #tpu.dot_dimension_numbers<[1], [0], [0], [1], [0, 0, 1, 1], [], []>} : vector<2x64xf32>, vector<64x128xf32>, vector<2x128xf32> -> vector<2x128xf32>
    %378 = vector.broadcast %30 : vector<1x128xf32> to vector<2x128xf32>
    %379 = arith.addf %377, %378 : vector<2x128xf32>
    %cst_102 = arith.constant 5.000000e-01 : f32
    %380 = vector.broadcast %cst_102 : f32 to vector<2x128xf32>
    %381 = arith.mulf %380, %379 : vector<2x128xf32>
    %382 = arith.select %36, %379, %381 : vector<2x128xi1>, vector<2x128xf32>
    %383 = math.tanh %382 : vector<2x128xf32>
    %cst_103 = arith.constant 5.000000e-01 : f32
    %384 = vector.broadcast %cst_103 : f32 to vector<2x128xf32>
    %385 = arith.mulf %384, %383 : vector<2x128xf32>
    %cst_104 = arith.constant 5.000000e-01 : f32
    %386 = vector.broadcast %cst_104 : f32 to vector<2x128xf32>
    %387 = arith.addf %385, %386 : vector<2x128xf32>
    %388 = arith.select %36, %383, %387 : vector<2x128xi1>, vector<2x128xf32>
    %389 = vector.extract_strided_slice %388 {offsets = [0, 0], sizes = [2, 32], strides = [1, 1]} : vector<2x128xf32> to vector<2x32xf32>
    %390 = vector.extract_strided_slice %388 {offsets = [0, 32], sizes = [2, 32], strides = [1, 1]} : vector<2x128xf32> to vector<2x32xf32>
    %391 = vector.extract_strided_slice %388 {offsets = [0, 64], sizes = [2, 32], strides = [1, 1]} : vector<2x128xf32> to vector<2x32xf32>
    %392 = vector.extract_strided_slice %388 {offsets = [0, 96], sizes = [2, 32], strides = [1, 1]} : vector<2x128xf32> to vector<2x32xf32>
    %393 = arith.mulf %390, %350 : vector<2x32xf32>
    %394 = arith.mulf %389, %391 : vector<2x32xf32>
    %395 = arith.addf %393, %394 : vector<2x32xf32>
    %396 = math.tanh %395 : vector<2x32xf32>
    %397 = arith.mulf %392, %396 : vector<2x32xf32>
    %c8_i32 = arith.constant 8 : i32
    %c0_105 = arith.constant 0 : index
    %c0_106 = arith.constant 0 : index
    %398 = vector.load %arg8[%c0_105, %c0_106] : memref<2x32xf32, #tpu.memory_space<vmem>>, vector<2x32xf32>
    tpu.vector_store %arg8[%c0_105, %c0_106], %397 {strides = array<i32>} : memref<2x32xf32, #tpu.memory_space<vmem>>, vector<2x32xf32>,
    return
  }
}

</mosaic_0001>

<llo_original>
// kernel: tpu_custom_call.1
$region0: #{tpu_custom_call.1}
  #allocation0 [shape = 'u32[]', space=smem, size = 0x4, offset = 0x4, fixed_abs, tag = 'smem constant byte address 0x4 - core index']
  #allocation1 [shape = 'u32[72,128]{1,0:T(1,128)}', space=vmem, size = 0x9000, scoped, tag = 'internal scratch']
  #allocation2 [shape = 'f32[8,2,128]{2,1,0:T(2,128)}', space=vmem, size = 0x2000, scoped, tag = 'scratch operand']
  %s0 = inlined_call_operand.hbm [shape: f32[2,8,16], index: 0, kind: input, shape index: {}]
  %s1 = inlined_call_operand.hbm [shape: f32[16,32], index: 1, kind: input, shape index: {}]
  %s2 = inlined_call_operand.vmem [shape: f32[1,32], index: 2, kind: input, shape index: {}]
  %s3 = inlined_call_operand.hbm [shape: f32[32,128], index: 3, kind: input, shape index: {}]
  %s4 = inlined_call_operand.hbm [shape: f32[32,128], index: 4, kind: input, shape index: {}]
  %s5 = inlined_call_operand.vmem [shape: f32[1,128], index: 5, kind: input, shape index: {}]
  %s6 = inlined_call_operand.hbm [shape: f32[64,128], index: 6, kind: input, shape index: {}]
  %s7 = inlined_call_operand.vmem [shape: f32[1,128], index: 7, kind: input, shape index: {}]
  %s8 = inlined_call_operand.hbm [shape: f32[2,32], index: 8, kind: output, shape index: {}]
  %s9 = sld [smem:[#allocation0]]
  $region62: #{tpu_custom_call.1} parent=0
    _
  %s11 = ssub.s32 1, %s9
  %s12 = scalar_select 0, %s11, %s9
  $region1: #{tpu_custom_call.1} parent=0
    #allocation3 [shape = 'u8[8192]{0}', space=vmem, size = 0x2000, scoped, tag = 'input window, operand 0, single buffered']
    #allocation4 [shape = 's32[1]{0}', space=sflag, size = 0x4, scoped, tag = 'scoped memory for tpu_custom_call.1']
    #allocation5 [shape = 's32[1]{0}', space=sflag, size = 0x4, scoped, tag = 'scoped memory for tpu_custom_call.1']
    #allocation6 [shape = 'u8[8192]{0}', space=vmem, size = 0x2000, scoped, tag = 'input window, operand 1, single buffered']
    #allocation7 [shape = 's32[1]{0}', space=sflag, size = 0x4, scoped, tag = 'scoped memory for tpu_custom_call.1']
    #allocation8 [shape = 'u8[16384]{0}', space=vmem, size = 0x4000, scoped, tag = 'input window, operand 3, single buffered']
    #allocation9 [shape = 'u8[16384]{0}', space=vmem, size = 0x4000, scoped, tag = 'input window, operand 4, single buffered']
    #allocation10 [shape = 's32[1]{0}', space=sflag, size = 0x4, scoped, tag = 'scoped memory for tpu_custom_call.1']
    #allocation11 [shape = 'u8[32768]{0}', space=vmem, size = 0x8000, scoped, tag = 'input window, operand 6, single buffered']
    #allocation12 [shape = 'u8[1024]{0}', space=vmem, size = 0x400, scoped, tag = 'output window, operand 0, single buffered']
    %13 = vsyncpa [#allocation4], 0
    %14 = vsyncpa [#allocation7], 0
    %15 = vsyncpa [#allocation10], 0
    %16 = vsyncpa [#allocation5], 0
    // Predicated region
    $region2: #{tpu_custom_call.1} parent=1 // pred_check
      _
    $region3: #{tpu_custom_call.1} parent=1 // pred_check_branch
      %18 = sbr.rel (0) target = $region5
    $region4: #{tpu_custom_call.1} parent=1 // pred_region
      %20 = vsyncadd [#allocation4], 0
      %s21 = sshll.u32 %s0, 4
      %s22 = int_to_ptr.hbm [resolvable:$true] %s21
      %s23 = sshll.u32 [#allocation3], 4
      %s24 = int_to_ptr.vmem [resolvable:$true] %s23
      %29 = dma.hbm_to_vmem [thread:$0]  %s22, 256, %s24, [#allocation4], 128, 128, 8
    $region5: #{tpu_custom_call.1} parent=1 // pred_fallthru
      _
    // Predicated region
    $region6: #{tpu_custom_call.1} parent=1 // pred_check
      _
    $region7: #{tpu_custom_call.1} parent=1 // pred_check_branch
      %31 = sbr.rel (0) target = $region9
    $region8: #{tpu_custom_call.1} parent=1 // pred_region
      %33 = vsyncadd [#allocation7], 0
      %s34 = sshll.u32 %s1, 4
      %s35 = int_to_ptr.hbm [resolvable:$true] %s34
      %s36 = sshll.u32 [#allocation6], 4
      %s37 = int_to_ptr.vmem [resolvable:$true] %s36
      %42 = dma.hbm_to_vmem [thread:$0]  %s35, 256, %s37, [#allocation7], 128, 128, 8
    $region9: #{tpu_custom_call.1} parent=1 // pred_fallthru
      _
    // Predicated region
    $region10: #{tpu_custom_call.1} parent=1 // pred_check
      _
    $region11: #{tpu_custom_call.1} parent=1 // pred_check_branch
      %44 = sbr.rel (0) target = $region13
    $region12: #{tpu_custom_call.1} parent=1 // pred_region
      _
    $region13: #{tpu_custom_call.1} parent=1 // pred_fallthru
      _
    // Predicated region
    $region14: #{tpu_custom_call.1} parent=1 // pred_check
      _
    $region15: #{tpu_custom_call.1} parent=1 // pred_check_branch
      %46 = sbr.rel (0) target = $region17
    $region16: #{tpu_custom_call.1} parent=1 // pred_region
      %48 = vsyncadd [#allocation7], 0
      %s49 = sshll.u32 %s3, 4
      %s50 = int_to_ptr.hbm [resolvable:$true] %s49
      %s51 = sshll.u32 [#allocation8], 4
      %s52 = int_to_ptr.vmem [resolvable:$true] %s51
      %57 = dma.hbm_to_vmem [thread:$0]  %s50, 512, %s52, [#allocation7], 128, 128, 8
    $region17: #{tpu_custom_call.1} parent=1 // pred_fallthru
      _
    // Predicated region
    $region18: #{tpu_custom_call.1} parent=1 // pred_check
      _
    $region19: #{tpu_custom_call.1} parent=1 // pred_check_branch
      %59 = sbr.rel (0) target = $region21
    $region20: #{tpu_custom_call.1} parent=1 // pred_region
      %61 = vsyncadd [#allocation10], 0
      %s62 = sshll.u32 %s4, 4
      %s63 = int_to_ptr.hbm [resolvable:$true] %s62
      %s64 = sshll.u32 [#allocation9], 4
      %s65 = int_to_ptr.vmem [resolvable:$true] %s64
      %70 = dma.hbm_to_vmem [thread:$0]  %s63, 512, %s65, [#allocation10], 128, 128, 8
    $region21: #{tpu_custom_call.1} parent=1 // pred_fallthru
      _
    // Predicated region
    $region22: #{tpu_custom_call.1} parent=1 // pred_check
      _
    $region23: #{tpu_custom_call.1} parent=1 // pred_check_branch
      %72 = sbr.rel (0) target = $region25
    $region24: #{tpu_custom_call.1} parent=1 // pred_region
      _
    $region25: #{tpu_custom_call.1} parent=1 // pred_fallthru
      _
    // Predicated region
    $region26: #{tpu_custom_call.1} parent=1 // pred_check
      _
    $region27: #{tpu_custom_call.1} parent=1 // pred_check_branch
      %74 = sbr.rel (0) target = $region29
    $region28: #{tpu_custom_call.1} parent=1 // pred_region
      %76 = vsyncadd [#allocation10], 0
      %s77 = sshll.u32 %s6, 4
      %s78 = int_to_ptr.hbm [resolvable:$true] %s77
      %s79 = sshll.u32 [#allocation11], 4
      %s80 = int_to_ptr.vmem [resolvable:$true] %s79
      %85 = dma.hbm_to_vmem [thread:$0]  %s78, 1024, %s80, [#allocation10], 128, 128, 8
    $region29: #{tpu_custom_call.1} parent=1 // pred_fallthru
      _
    // Predicated region
    $region30: #{tpu_custom_call.1} parent=1 // pred_check
      _
    $region31: #{tpu_custom_call.1} parent=1 // pred_check_branch
      %87 = sbr.rel (0) target = $region33
    $region32: #{tpu_custom_call.1} parent=1 // pred_region
      _
    $region33: #{tpu_custom_call.1} parent=1 // pred_fallthru
      _
    // Predicated region
    $region34: #{tpu_custom_call.1} parent=1 // pred_check
      _
    $region35: #{tpu_custom_call.1} parent=1 // pred_check_branch
      %89 = sbr.rel (0) target = $region37
    $region36: #{tpu_custom_call.1} parent=1 // pred_region
      %91 = dma.done [#allocation4], 256
    $region37: #{tpu_custom_call.1} parent=1 // pred_fallthru
      _
    // Predicated region
    $region38: #{tpu_custom_call.1} parent=1 // pred_check
      _
    $region39: #{tpu_custom_call.1} parent=1 // pred_check_branch
      %93 = sbr.rel (0) target = $region41
    $region40: #{tpu_custom_call.1} parent=1 // pred_region
      %95 = dma.done [#allocation7], 256
    $region41: #{tpu_custom_call.1} parent=1 // pred_fallthru
      _
    // Predicated region
    $region42: #{tpu_custom_call.1} parent=1 // pred_check
      _
    $region43: #{tpu_custom_call.1} parent=1 // pred_check_branch
      %97 = sbr.rel (0) target = $region45
    $region44: #{tpu_custom_call.1} parent=1 // pred_region
      %99 = dma.done [#allocation7], 512
    $region45: #{tpu_custom_call.1} parent=1 // pred_fallthru
      _
    // Predicated region
    $region46: #{tpu_custom_call.1} parent=1 // pred_check
      _
    $region47: #{tpu_custom_call.1} parent=1 // pred_check_branch
      %101 = sbr.rel (0) target = $region49
    $region48: #{tpu_custom_call.1} parent=1 // pred_region
      %103 = dma.done [#allocation10], 512
    $region49: #{tpu_custom_call.1} parent=1 // pred_fallthru
      _
    // Predicated region
    $region50: #{tpu_custom_call.1} parent=1 // pred_check
      _
    $region51: #{tpu_custom_call.1} parent=1 // pred_check_branch
      %105 = sbr.rel (0) target = $region53
    $region52: #{tpu_custom_call.1} parent=1 // pred_region
      %107 = dma.done [#allocation10], 1024
    $region53: #{tpu_custom_call.1} parent=1 // pred_fallthru
      _
    %v108 = vld [vmem:[#allocation3] sm:$0xff]
    %v109 = vld [vmem:[#allocation3 + $0x8] sm:$0xff]
    %v110 = vld [vmem:[#allocation6] sm:$0xff]
    %v111 = vld [vmem:[#allocation6 + $0x8] sm:$0xff]
    %v112 = vld [vmem:[%s2] sm:$0x1]
    %v114 = vperm.slane %v112, 0
    %vm116 = vcmask 130048
    %v118 = vsel %vm116, %v108, 0
    %v121 = vsel %vm116, %v109, 0
    %123 = vmatpush.msra.mxu0 0.0
    %124 = vmatpush.msra.mxu0 0.0
    %125 = vmatpush.msra.mxu0 0.0
    %126 = vmatpush.msra.mxu0 0.0
    %127 = vmatpush.msra.mxu0 0.0
    %128 = vmatpush.msra.mxu0 0.0
    %129 = vmatpush.msra.mxu0 0.0
    %130 = vmatpush.msra.mxu0 0.0
    %131 = vmatpush.msra.mxu0 0.0
    %132 = vmatpush.msra.mxu0 0.0
    %133 = vmatpush.msra.mxu0 0.0
    %134 = vmatpush.msra.mxu0 0.0
    %135 = vmatpush.msra.mxu0 0.0
    %136 = vmatpush.msra.mxu0 0.0
    %137 = vmatpush.msra.mxu0 %v111
    %138 = vmatpush.msra.mxu0 %v110
    %139 = vmatmul.f32.gmra.mxu0 %v118
    %v140 = vpop.f32.mrf.mxu0
    %v141 = vadd.f32 %v114, %v140
    %142 = vmatmul.f32.gmra.mxu0 %v121
    %v143 = vpop.f32.mrf.mxu0
    %v144 = vadd.f32 %v114, %v143
    %145 = vdwg.mxu0
    %vm146 = vcmp.gt.f32.partialorder %v141, 0.0
    %vm147 = vcmp.gt.f32.partialorder %v144, 0.0
    %v148 = vmul.f32 %v141, 0.2
    %v149 = vmul.f32 %v144, 0.2
    %v150 = vsel %vm146, %v141, %v148
    %v151 = vsel %vm147, %v144, %v149
    %v152 = vld [vmem:[#allocation8] sm:$0xff]
    %v153 = vld [vmem:[#allocation8 + $0x8] sm:$0xff]
    %v154 = vld [vmem:[#allocation8 + $0x10] sm:$0xff]
    %v155 = vld [vmem:[#allocation8 + $0x18] sm:$0xff]
    %v156 = vld [vmem:[%s5] sm:$0x1]
    %v158 = vperm.slane %v156, 0
    %vm160 = vcmask 261120
    %v162 = vsel %vm160, %v150, 0
    %v165 = vsel %vm160, %v151, 0
    %167 = vmatpush.msra.mxu0 0.0
    %168 = vmatpush.msra.mxu0 0.0
    %169 = vmatpush.msra.mxu0 0.0
    %170 = vmatpush.msra.mxu0 0.0
    %171 = vmatpush.msra.mxu0 0.0
    %172 = vmatpush.msra.mxu0 0.0
    %173 = vmatpush.msra.mxu0 0.0
    %174 = vmatpush.msra.mxu0 0.0
    %175 = vmatpush.msra.mxu0 0.0
    %176 = vmatpush.msra.mxu0 0.0
    %177 = vmatpush.msra.mxu0 0.0
    %178 = vmatpush.msra.mxu0 0.0
    %179 = vmatpush.msra.mxu0 %v155
    %180 = vmatpush.msra.mxu0 %v154
    %181 = vmatpush.msra.mxu0 %v153
    %182 = vmatpush.msra.mxu0 %v152
    %183 = vmatmul.f32.gmra.mxu0 %v162
    %v184 = vpop.f32.mrf.mxu0
    %v185 = vadd.f32 %v158, %v184
    %186 = vmatmul.f32.gmra.mxu0 %v165
    %v187 = vpop.f32.mrf.mxu0
    %v188 = vadd.f32 %v158, %v187
    %189 = vdwg.mxu0
    %v191 = vrot.slane %v185, 1
    %v192 = vrot.slane %v185, 2
    %v193 = vrot.slane %v185, 3
    %v194 = vrot.slane %v185, 4
    %v195 = vrot.slane %v185, 5
    %v196 = vrot.slane %v185, 6
    %v197 = vrot.slane %v185, 7
    %205 = vst [vmem:[#allocation2] sm:$0x1] %v185
    %206 = vst [vmem:[#allocation2 + $0x2] sm:$0x1] %v191
    %207 = vst [vmem:[#allocation2 + $0x4] sm:$0x1] %v192
    %208 = vst [vmem:[#allocation2 + $0x6] sm:$0x1] %v193
    %209 = vst [vmem:[#allocation2 + $0x8] sm:$0x1] %v194
    %210 = vst [vmem:[#allocation2 + $0xa] sm:$0x1] %v195
    %211 = vst [vmem:[#allocation2 + $0xc] sm:$0x1] %v196
    %212 = vst [vmem:[#allocation2 + $0xe] sm:$0x1] %v197
    %v214 = vrot.slane %v188, 1
    %v215 = vrot.slane %v188, 2
    %v216 = vrot.slane %v188, 3
    %v217 = vrot.slane %v188, 4
    %v218 = vrot.slane %v188, 5
    %v219 = vrot.slane %v188, 6
    %v220 = vrot.slane %v188, 7
    %228 = vst [vmem:[#allocation2 + $0x1] sm:$0x1] %v188
    %229 = vst [vmem:[#allocation2 + $0x3] sm:$0x1] %v214
    %230 = vst [vmem:[#allocation2 + $0x5] sm:$0x1] %v215
    %231 = vst [vmem:[#allocation2 + $0x7] sm:$0x1] %v216
    %232 = vst [vmem:[#allocation2 + $0x9] sm:$0x1] %v217
    %233 = vst [vmem:[#allocation2 + $0xb] sm:$0x1] %v218
    %234 = vst [vmem:[#allocation2 + $0xd] sm:$0x1] %v219
    %235 = vst [vmem:[#allocation2 + $0xf] sm:$0x1] %v220
    %v236 = vld [vmem:[#allocation9] sm:$0xff]
    %v237 = vld [vmem:[#allocation9 + $0x8] sm:$0xff]
    %v238 = vld [vmem:[#allocation9 + $0x10] sm:$0xff]
    %v239 = vld [vmem:[#allocation9 + $0x18] sm:$0xff]
    %v240 = vld [vmem:[#allocation11] sm:$0xff]
    %v241 = vld [vmem:[#allocation11 + $0x8] sm:$0xff]
    %v242 = vld [vmem:[#allocation11 + $0x10] sm:$0xff]
    %v243 = vld [vmem:[#allocation11 + $0x18] sm:$0xff]
    %v244 = vld [vmem:[#allocation11 + $0x20] sm:$0xff]
    %v245 = vld [vmem:[#allocation11 + $0x28] sm:$0xff]
    %v246 = vld [vmem:[#allocation11 + $0x30] sm:$0xff]
    %v247 = vld [vmem:[#allocation11 + $0x38] sm:$0xff]
    %v248 = vld [vmem:[%s7] sm:$0x1]
    %v249 = vlaneseq
    %v250 = vand.u32 %v249, 127
    %vm251 = vcmp.ge.s32.totalorder %v250, 64
    %vm252 = vcmp.lt.s32.totalorder %v250, 96
    %vm253 = vmand %vm251, %vm252
    %v254 = vld [vmem:[#allocation2] sm:$0x3]
    %v256 = vsel %vm160, 0.0, 0
    %258 = vmatpush.msra.mxu0 0.0
    %259 = vmatpush.msra.mxu0 0.0
    %260 = vmatpush.msra.mxu0 0.0
    %261 = vmatpush.msra.mxu0 0.0
    %262 = vmatpush.msra.mxu0 0.0
    %263 = vmatpush.msra.mxu0 0.0
    %264 = vmatpush.msra.mxu0 0.0
    %265 = vmatpush.msra.mxu0 0.0
    %266 = vmatpush.msra.mxu0 0.0
    %267 = vmatpush.msra.mxu0 0.0
    %268 = vmatpush.msra.mxu0 0.0
    %269 = vmatpush.msra.mxu0 0.0
    %270 = vmatpush.msra.mxu0 %v239
    %271 = vmatpush.msra.mxu0 %v238
    %272 = vmatpush.msra.mxu0 %v237
    %273 = vmatpush.msra.mxu0 %v236
    %274 = vmatmul.f32.gmra.mxu0 %v256
    %v275 = vpop.f32.mrf.mxu0
    %v276 = vadd.f32 0.0, %v275
    %277 = vdwg.mxu0
    %v278 = vadd.f32 %v254, %v276
    %v279 = vmul.f32 %v278, 0.5
    %v280 = vsel %vm253, %v278, %v279
    %v281 = vtanh.pop %v280
    %v282 = vmul.f32 %v281, 0.5
    %v283 = vadd.f32 %v282, 0.5
    %v284 = vsel %vm253, %v281, %v283
    %v285 = vmul.f32 %v284, 0.0
    %287 = vrot.lane.b32.xlu0 %v284, 64
    %v288 = vpop.permute.xlu0 %287
    %v290 = vmul.f32 %v284, %v288
    %292 = vrot.lane.b32.xlu0 %v290, 32
    %v293 = vpop.permute.xlu0 %292
    %v295 = vadd.f32 %v285, %v293
    %v296 = vtanh.pop %v295
    %298 = vrot.lane.b32.xlu0 %v296, 64
    %v299 = vpop.permute.xlu0 %298
    %v301 = vmul.f32 %v284, %v299
    %303 = vrot.lane.b32.xlu0 %v301, 32
    %v304 = vpop.permute.xlu0 %303
    %v306 = vsel %vm160, %v304, 0.0
    %v308 = vperm.slane %v248, 0
    %vm310 = vcmask 523264
    %v312 = vsel %vm310, %v306, 0
    %314 = vmatpush.msra.mxu0 0.0
    %315 = vmatpush.msra.mxu0 0.0
    %316 = vmatpush.msra.mxu0 0.0
    %317 = vmatpush.msra.mxu0 0.0
    %318 = vmatpush.msra.mxu0 0.0
    %319 = vmatpush.msra.mxu0 0.0
    %320 = vmatpush.msra.mxu0 0.0
    %321 = vmatpush.msra.mxu0 0.0
    %322 = vmatpush.msra.mxu0 %v247
    %323 = vmatpush.msra.mxu0 %v246
    %324 = vmatpush.msra.mxu0 %v245
    %325 = vmatpush.msra.mxu0 %v244
    %326 = vmatpush.msra.mxu0 %v243
    %327 = vmatpush.msra.mxu0 %v242
    %328 = vmatpush.msra.mxu0 %v241
    %329 = vmatpush.msra.mxu0 %v240
    %330 = vmatmul.f32.gmra.mxu0 %v312
    %v331 = vpop.f32.mrf.mxu0
    %v332 = vadd.f32 %v308, %v331
    %333 = vdwg.mxu0
    %v334 = vmul.f32 %v332, 0.5
    %v335 = vsel %vm253, %v332, %v334
    %v336 = vtanh.pop %v335
    %v337 = vmul.f32 %v336, 0.5
    %v338 = vadd.f32 %v337, 0.5
    %v339 = vsel %vm253, %v336, %v338
    %v340 = vmul.f32 %v339, 0.0
    %342 = vrot.lane.b32.xlu0 %v339, 64
    %v343 = vpop.permute.xlu0 %342
    %v345 = vmul.f32 %v339, %v343
    %347 = vrot.lane.b32.xlu0 %v345, 32
    %v348 = vpop.permute.xlu0 %347
    %v350 = vadd.f32 %v340, %v348
    %v351 = vtanh.pop %v350
    %353 = vrot.lane.b32.xlu0 %v351, 64
    %v354 = vpop.permute.xlu0 %353
    %v356 = vmul.f32 %v339, %v354
    %s357 = scalar_lea.vmem [#allocation2], 2
    %v358 = vld [vmem:[%s357] sm:$0x3]
    %v359 = vsel %vm160, %v304, 0
    %361 = vmatpush.msra.mxu0 0.0
    %362 = vmatpush.msra.mxu0 0.0
    %363 = vmatpush.msra.mxu0 0.0
    %364 = vmatpush.msra.mxu0 0.0
    %365 = vmatpush.msra.mxu0 0.0
    %366 = vmatpush.msra.mxu0 0.0
    %367 = vmatpush.msra.mxu0 0.0
    %368 = vmatpush.msra.mxu0 0.0
    %369 = vmatpush.msra.mxu0 0.0
    %370 = vmatpush.msra.mxu0 0.0
    %371 = vmatpush.msra.mxu0 0.0
    %372 = vmatpush.msra.mxu0 0.0
    %373 = vmatpush.msra.mxu0 %v239
    %374 = vmatpush.msra.mxu0 %v238
    %375 = vmatpush.msra.mxu0 %v237
    %376 = vmatpush.msra.mxu0 %v236
    %377 = vmatmul.f32.gmra.mxu0 %v359
    %v378 = vpop.f32.mrf.mxu0
    %v379 = vadd.f32 0.0, %v378
    %380 = vdwg.mxu0
    %v381 = vadd.f32 %v358, %v379
    %v382 = vmul.f32 %v381, 0.5
    %v383 = vsel %vm253, %v381, %v382
    %v384 = vtanh.pop %v383
    %v385 = vmul.f32 %v384, 0.5
    %v386 = vadd.f32 %v385, 0.5
    %v387 = vsel %vm253, %v384, %v386
    %v388 = vmul.f32 %v387, %v295
    %390 = vrot.lane.b32.xlu0 %v387, 64
    %v391 = vpop.permute.xlu0 %390
    %v393 = vmul.f32 %v387, %v391
    %395 = vrot.lane.b32.xlu0 %v393, 32
    %v396 = vpop.permute.xlu0 %395
    %v398 = vadd.f32 %v388, %v396
    %v399 = vtanh.pop %v398
    %401 = vrot.lane.b32.xlu0 %v399, 64
    %v402 = vpop.permute.xlu0 %401
    %v404 = vmul.f32 %v387, %v402
    %406 = vrot.lane.b32.xlu0 %v404, 32
    %v407 = vpop.permute.xlu0 %406
    %410 = vrot.lane.b32.xlu0 %v356, 64
    %v411 = vpop.permute.xlu0 %410
    %v413 = vsel %vm160, %v407, %v411
    %v415 = vsel %vm310, %v413, 0
    %417 = vmatpush.msra.mxu0 0.0
    %418 = vmatpush.msra.mxu0 0.0
    %419 = vmatpush.msra.mxu0 0.0
    %420 = vmatpush.msra.mxu0 0.0
    %421 = vmatpush.msra.mxu0 0.0
    %422 = vmatpush.msra.mxu0 0.0
    %423 = vmatpush.msra.mxu0 0.0
    %424 = vmatpush.msra.mxu0 0.0
    %425 = vmatpush.msra.mxu0 %v247
    %426 = vmatpush.msra.mxu0 %v246
    %427 = vmatpush.msra.mxu0 %v245
    %428 = vmatpush.msra.mxu0 %v244
    %429 = vmatpush.msra.mxu0 %v243
    %430 = vmatpush.msra.mxu0 %v242
    %431 = vmatpush.msra.mxu0 %v241
    %432 = vmatpush.msra.mxu0 %v240
    %433 = vmatmul.f32.gmra.mxu0 %v415
    %v434 = vpop.f32.mrf.mxu0
    %v435 = vadd.f32 %v308, %v434
    %436 = vdwg.mxu0
    %v437 = vmul.f32 %v435, 0.5
    %v438 = vsel %vm253, %v435, %v437
    %v439 = vtanh.pop %v438
    %v440 = vmul.f32 %v439, 0.5
    %v441 = vadd.f32 %v440, 0.5
    %v442 = vsel %vm253, %v439, %v441
    %v443 = vmul.f32 %v442, %v350
    %445 = vrot.lane.b32.xlu0 %v442, 64
    %v446 = vpop.permute.xlu0 %445
    %v448 = vmul.f32 %v442, %v446
    %450 = vrot.lane.b32.xlu0 %v448, 32
    %v451 = vpop.permute.xlu0 %450
    %v453 = vadd.f32 %v443, %v451
    %v454 = vtanh.pop %v453
    %456 = vrot.lane.b32.xlu0 %v454, 64
    %v457 = vpop.permute.xlu0 %456
    %v459 = vmul.f32 %v442, %v457
    %s460 = scalar_lea.vmem [#allocation2], 4
    %v461 = vld [vmem:[%s460] sm:$0x3]
    %v462 = vsel %vm160, %v407, 0
    %464 = vmatpush.msra.mxu0 0.0
    %465 = vmatpush.msra.mxu0 0.0
    %466 = vmatpush.msra.mxu0 0.0
    %467 = vmatpush.msra.mxu0 0.0
    %468 = vmatpush.msra.mxu0 0.0
    %469 = vmatpush.msra.mxu0 0.0
    %470 = vmatpush.msra.mxu0 0.0
    %471 = vmatpush.msra.mxu0 0.0
    %472 = vmatpush.msra.mxu0 0.0
    %473 = vmatpush.msra.mxu0 0.0
    %474 = vmatpush.msra.mxu0 0.0
    %475 = vmatpush.msra.mxu0 0.0
    %476 = vmatpush.msra.mxu0 %v239
    %477 = vmatpush.msra.mxu0 %v238
    %478 = vmatpush.msra.mxu0 %v237
    %479 = vmatpush.msra.mxu0 %v236
    %480 = vmatmul.f32.gmra.mxu0 %v462
    %v481 = vpop.f32.mrf.mxu0
    %v482 = vadd.f32 0.0, %v481
    %483 = vdwg.mxu0
    %v484 = vadd.f32 %v461, %v482
    %v485 = vmul.f32 %v484, 0.5
    %v486 = vsel %vm253, %v484, %v485
    %v487 = vtanh.pop %v486
    %v488 = vmul.f32 %v487, 0.5
    %v489 = vadd.f32 %v488, 0.5
    %v490 = vsel %vm253, %v487, %v489
    %v491 = vmul.f32 %v490, %v398
    %493 = vrot.lane.b32.xlu0 %v490, 64
    %v494 = vpop.permute.xlu0 %493
    %v496 = vmul.f32 %v490, %v494
    %498 = vrot.lane.b32.xlu0 %v496, 32
    %v499 = vpop.permute.xlu0 %498
    %v501 = vadd.f32 %v491, %v499
    %v502 = vtanh.pop %v501
    %504 = vrot.lane.b32.xlu0 %v502, 64
    %v505 = vpop.permute.xlu0 %504
    %v507 = vmul.f32 %v490, %v505
    %509 = vrot.lane.b32.xlu0 %v507, 32
    %v510 = vpop.permute.xlu0 %509
    %513 = vrot.lane.b32.xlu0 %v459, 64
    %v514 = vpop.permute.xlu0 %513
    %v516 = vsel %vm160, %v510, %v514
    %v518 = vsel %vm310, %v516, 0
    %520 = vmatpush.msra.mxu0 0.0
    %521 = vmatpush.msra.mxu0 0.0
    %522 = vmatpush.msra.mxu0 0.0
    %523 = vmatpush.msra.mxu0 0.0
    %524 = vmatpush.msra.mxu0 0.0
    %525 = vmatpush.msra.mxu0 0.0
    %526 = vmatpush.msra.mxu0 0.0
    %527 = vmatpush.msra.mxu0 0.0
    %528 = vmatpush.msra.mxu0 %v247
    %529 = vmatpush.msra.mxu0 %v246
    %530 = vmatpush.msra.mxu0 %v245
    %531 = vmatpush.msra.mxu0 %v244
    %532 = vmatpush.msra.mxu0 %v243
    %533 = vmatpush.msra.mxu0 %v242
    %534 = vmatpush.msra.mxu0 %v241
    %535 = vmatpush.msra.mxu0 %v240
    %536 = vmatmul.f32.gmra.mxu0 %v518
    %v537 = vpop.f32.mrf.mxu0
    %v538 = vadd.f32 %v308, %v537
    %539 = vdwg.mxu0
    %v540 = vmul.f32 %v538, 0.5
    %v541 = vsel %vm253, %v538, %v540
    %v542 = vtanh.pop %v541
    %v543 = vmul.f32 %v542, 0.5
    %v544 = vadd.f32 %v543, 0.5
    %v545 = vsel %vm253, %v542, %v544
    %v546 = vmul.f32 %v545, %v453
    %548 = vrot.lane.b32.xlu0 %v545, 64
    %v549 = vpop.permute.xlu0 %548
    %v551 = vmul.f32 %v545, %v549
    %553 = vrot.lane.b32.xlu0 %v551, 32
    %v554 = vpop.permute.xlu0 %553
    %v556 = vadd.f32 %v546, %v554
    %v557 = vtanh.pop %v556
    %559 = vrot.lane.b32.xlu0 %v557, 64
    %v560 = vpop.permute.xlu0 %559
    %v562 = vmul.f32 %v545, %v560
    %s563 = scalar_lea.vmem [#allocation2], 6
    %v564 = vld [vmem:[%s563] sm:$0x3]
    %v565 = vsel %vm160, %v510, 0
    %567 = vmatpush.msra.mxu0 0.0
    %568 = vmatpush.msra.mxu0 0.0
    %569 = vmatpush.msra.mxu0 0.0
    %570 = vmatpush.msra.mxu0 0.0
    %571 = vmatpush.msra.mxu0 0.0
    %572 = vmatpush.msra.mxu0 0.0
    %573 = vmatpush.msra.mxu0 0.0
    %574 = vmatpush.msra.mxu0 0.0
    %575 = vmatpush.msra.mxu0 0.0
    %576 = vmatpush.msra.mxu0 0.0
    %577 = vmatpush.msra.mxu0 0.0
    %578 = vmatpush.msra.mxu0 0.0
    %579 = vmatpush.msra.mxu0 %v239
    %580 = vmatpush.msra.mxu0 %v238
    %581 = vmatpush.msra.mxu0 %v237
    %582 = vmatpush.msra.mxu0 %v236
    %583 = vmatmul.f32.gmra.mxu0 %v565
    %v584 = vpop.f32.mrf.mxu0
    %v585 = vadd.f32 0.0, %v584
    %586 = vdwg.mxu0
    %v587 = vadd.f32 %v564, %v585
    %v588 = vmul.f32 %v587, 0.5
    %v589 = vsel %vm253, %v587, %v588
    %v590 = vtanh.pop %v589
    %v591 = vmul.f32 %v590, 0.5
    %v592 = vadd.f32 %v591, 0.5
    %v593 = vsel %vm253, %v590, %v592
    %v594 = vmul.f32 %v593, %v501
    %596 = vrot.lane.b32.xlu0 %v593, 64
    %v597 = vpop.permute.xlu0 %596
    %v599 = vmul.f32 %v593, %v597
    %601 = vrot.lane.b32.xlu0 %v599, 32
    %v602 = vpop.permute.xlu0 %601
    %v604 = vadd.f32 %v594, %v602
    %v605 = vtanh.pop %v604
    %607 = vrot.lane.b32.xlu0 %v605, 64
    %v608 = vpop.permute.xlu0 %607
    %v610 = vmul.f32 %v593, %v608
    %612 = vrot.lane.b32.xlu0 %v610, 32
    %v613 = vpop.permute.xlu0 %612
    %616 = vrot.lane.b32.xlu0 %v562, 64
    %v617 = vpop.permute.xlu0 %616
    %v619 = vsel %vm160, %v613, %v617
    %v621 = vsel %vm310, %v619, 0
    %623 = vmatpush.msra.mxu0 0.0
    %624 = vmatpush.msra.mxu0 0.0
    %625 = vmatpush.msra.mxu0 0.0
    %626 = vmatpush.msra.mxu0 0.0
    %627 = vmatpush.msra.mxu0 0.0
    %628 = vmatpush.msra.mxu0 0.0
    %629 = vmatpush.msra.mxu0 0.0
    %630 = vmatpush.msra.mxu0 0.0
    %631 = vmatpush.msra.mxu0 %v247
    %632 = vmatpush.msra.mxu0 %v246
    %633 = vmatpush.msra.mxu0 %v245
    %634 = vmatpush.msra.mxu0 %v244
    %635 = vmatpush.msra.mxu0 %v243
    %636 = vmatpush.msra.mxu0 %v242
    %637 = vmatpush.msra.mxu0 %v241
    %638 = vmatpush.msra.mxu0 %v240
    %639 = vmatmul.f32.gmra.mxu0 %v621
    %v640 = vpop.f32.mrf.mxu0
    %v641 = vadd.f32 %v308, %v640
    %642 = vdwg.mxu0
    %v643 = vmul.f32 %v641, 0.5
    %v644 = vsel %vm253, %v641, %v643
    %v645 = vtanh.pop %v644
    %v646 = vmul.f32 %v645, 0.5
    %v647 = vadd.f32 %v646, 0.5
    %v648 = vsel %vm253, %v645, %v647
    %v649 = vmul.f32 %v648, %v556
    %651 = vrot.lane.b32.xlu0 %v648, 64
    %v652 = vpop.permute.xlu0 %651
    %v654 = vmul.f32 %v648, %v652
    %656 = vrot.lane.b32.xlu0 %v654, 32
    %v657 = vpop.permute.xlu0 %656
    %v659 = vadd.f32 %v649, %v657
    %v660 = vtanh.pop %v659
    %662 = vrot.lane.b32.xlu0 %v660, 64
    %v663 = vpop.permute.xlu0 %662
    %v665 = vmul.f32 %v648, %v663
    %s666 = scalar_lea.vmem [#allocation2], 8
    %v667 = vld [vmem:[%s666] sm:$0x3]
    %v668 = vsel %vm160, %v613, 0
    %670 = vmatpush.msra.mxu0 0.0
    %671 = vmatpush.msra.mxu0 0.0
    %672 = vmatpush.msra.mxu0 0.0
    %673 = vmatpush.msra.mxu0 0.0
    %674 = vmatpush.msra.mxu0 0.0
    %675 = vmatpush.msra.mxu0 0.0
    %676 = vmatpush.msra.mxu0 0.0
    %677 = vmatpush.msra.mxu0 0.0
    %678 = vmatpush.msra.mxu0 0.0
    %679 = vmatpush.msra.mxu0 0.0
    %680 = vmatpush.msra.mxu0 0.0
    %681 = vmatpush.msra.mxu0 0.0
    %682 = vmatpush.msra.mxu0 %v239
    %683 = vmatpush.msra.mxu0 %v238
    %684 = vmatpush.msra.mxu0 %v237
    %685 = vmatpush.msra.mxu0 %v236
    %686 = vmatmul.f32.gmra.mxu0 %v668
    %v687 = vpop.f32.mrf.mxu0
    %v688 = vadd.f32 0.0, %v687
    %689 = vdwg.mxu0
    %v690 = vadd.f32 %v667, %v688
    %v691 = vmul.f32 %v690, 0.5
    %v692 = vsel %vm253, %v690, %v691
    %v693 = vtanh.pop %v692
    %v694 = vmul.f32 %v693, 0.5
    %v695 = vadd.f32 %v694, 0.5
    %v696 = vsel %vm253, %v693, %v695
    %v697 = vmul.f32 %v696, %v604
    %699 = vrot.lane.b32.xlu0 %v696, 64
    %v700 = vpop.permute.xlu0 %699
    %v702 = vmul.f32 %v696, %v700
    %704 = vrot.lane.b32.xlu0 %v702, 32
    %v705 = vpop.permute.xlu0 %704
    %v707 = vadd.f32 %v697, %v705
    %v708 = vtanh.pop %v707
    %710 = vrot.lane.b32.xlu0 %v708, 64
    %v711 = vpop.permute.xlu0 %710
    %v713 = vmul.f32 %v696, %v711
    %715 = vrot.lane.b32.xlu0 %v713, 32
    %v716 = vpop.permute.xlu0 %715
    %719 = vrot.lane.b32.xlu0 %v665, 64
    %v720 = vpop.permute.xlu0 %719
    %v722 = vsel %vm160, %v716, %v720
    %v724 = vsel %vm310, %v722, 0
    %726 = vmatpush.msra.mxu0 0.0
    %727 = vmatpush.msra.mxu0 0.0
    %728 = vmatpush.msra.mxu0 0.0
    %729 = vmatpush.msra.mxu0 0.0
    %730 = vmatpush.msra.mxu0 0.0
    %731 = vmatpush.msra.mxu0 0.0
    %732 = vmatpush.msra.mxu0 0.0
    %733 = vmatpush.msra.mxu0 0.0
    %734 = vmatpush.msra.mxu0 %v247
    %735 = vmatpush.msra.mxu0 %v246
    %736 = vmatpush.msra.mxu0 %v245
    %737 = vmatpush.msra.mxu0 %v244
    %738 = vmatpush.msra.mxu0 %v243
    %739 = vmatpush.msra.mxu0 %v242
    %740 = vmatpush.msra.mxu0 %v241
    %741 = vmatpush.msra.mxu0 %v240
    %742 = vmatmul.f32.gmra.mxu0 %v724
    %v743 = vpop.f32.mrf.mxu0
    %v744 = vadd.f32 %v308, %v743
    %745 = vdwg.mxu0
    %v746 = vmul.f32 %v744, 0.5
    %v747 = vsel %vm253, %v744, %v746
    %v748 = vtanh.pop %v747
    %v749 = vmul.f32 %v748, 0.5
    %v750 = vadd.f32 %v749, 0.5
    %v751 = vsel %vm253, %v748, %v750
    %v752 = vmul.f32 %v751, %v659
    %754 = vrot.lane.b32.xlu0 %v751, 64
    %v755 = vpop.permute.xlu0 %754
    %v757 = vmul.f32 %v751, %v755
    %759 = vrot.lane.b32.xlu0 %v757, 32
    %v760 = vpop.permute.xlu0 %759
    %v762 = vadd.f32 %v752, %v760
    %v763 = vtanh.pop %v762
    %765 = vrot.lane.b32.xlu0 %v763, 64
    %v766 = vpop.permute.xlu0 %765
    %v768 = vmul.f32 %v751, %v766
    %s769 = scalar_lea.vmem [#allocation2], 10
    %v770 = vld [vmem:[%s769] sm:$0x3]
    %v771 = vsel %vm160, %v716, 0
    %773 = vmatpush.msra.mxu0 0.0
    %774 = vmatpush.msra.mxu0 0.0
    %775 = vmatpush.msra.mxu0 0.0
    %776 = vmatpush.msra.mxu0 0.0
    %777 = vmatpush.msra.mxu0 0.0
    %778 = vmatpush.msra.mxu0 0.0
    %779 = vmatpush.msra.mxu0 0.0
    %780 = vmatpush.msra.mxu0 0.0
    %781 = vmatpush.msra.mxu0 0.0
    %782 = vmatpush.msra.mxu0 0.0
    %783 = vmatpush.msra.mxu0 0.0
    %784 = vmatpush.msra.mxu0 0.0
    %785 = vmatpush.msra.mxu0 %v239
    %786 = vmatpush.msra.mxu0 %v238
    %787 = vmatpush.msra.mxu0 %v237
    %788 = vmatpush.msra.mxu0 %v236
    %789 = vmatmul.f32.gmra.mxu0 %v771
    %v790 = vpop.f32.mrf.mxu0
    %v791 = vadd.f32 0.0, %v790
    %792 = vdwg.mxu0
    %v793 = vadd.f32 %v770, %v791
    %v794 = vmul.f32 %v793, 0.5
    %v795 = vsel %vm253, %v793, %v794
    %v796 = vtanh.pop %v795
    %v797 = vmul.f32 %v796, 0.5
    %v798 = vadd.f32 %v797, 0.5
    %v799 = vsel %vm253, %v796, %v798
    %v800 = vmul.f32 %v799, %v707
    %802 = vrot.lane.b32.xlu0 %v799, 64
    %v803 = vpop.permute.xlu0 %802
    %v805 = vmul.f32 %v799, %v803
    %807 = vrot.lane.b32.xlu0 %v805, 32
    %v808 = vpop.permute.xlu0 %807
    %v810 = vadd.f32 %v800, %v808
    %v811 = vtanh.pop %v810
    %813 = vrot.lane.b32.xlu0 %v811, 64
    %v814 = vpop.permute.xlu0 %813
    %v816 = vmul.f32 %v799, %v814
    %818 = vrot.lane.b32.xlu0 %v816, 32
    %v819 = vpop.permute.xlu0 %818
    %822 = vrot.lane.b32.xlu0 %v768, 64
    %v823 = vpop.permute.xlu0 %822
    %v825 = vsel %vm160, %v819, %v823
    %v827 = vsel %vm310, %v825, 0
    %829 = vmatpush.msra.mxu0 0.0
    %830 = vmatpush.msra.mxu0 0.0
    %831 = vmatpush.msra.mxu0 0.0
    %832 = vmatpush.msra.mxu0 0.0
    %833 = vmatpush.msra.mxu0 0.0
    %834 = vmatpush.msra.mxu0 0.0
    %835 = vmatpush.msra.mxu0 0.0
    %836 = vmatpush.msra.mxu0 0.0
    %837 = vmatpush.msra.mxu0 %v247
    %838 = vmatpush.msra.mxu0 %v246
    %839 = vmatpush.msra.mxu0 %v245
    %840 = vmatpush.msra.mxu0 %v244
    %841 = vmatpush.msra.mxu0 %v243
    %842 = vmatpush.msra.mxu0 %v242
    %843 = vmatpush.msra.mxu0 %v241
    %844 = vmatpush.msra.mxu0 %v240
    %845 = vmatmul.f32.gmra.mxu0 %v827
    %v846 = vpop.f32.mrf.mxu0
    %v847 = vadd.f32 %v308, %v846
    %848 = vdwg.mxu0
    %v849 = vmul.f32 %v847, 0.5
    %v850 = vsel %vm253, %v847, %v849
    %v851 = vtanh.pop %v850
    %v852 = vmul.f32 %v851, 0.5
    %v853 = vadd.f32 %v852, 0.5
    %v854 = vsel %vm253, %v851, %v853
    %v855 = vmul.f32 %v854, %v762
    %857 = vrot.lane.b32.xlu0 %v854, 64
    %v858 = vpop.permute.xlu0 %857
    %v860 = vmul.f32 %v854, %v858
    %862 = vrot.lane.b32.xlu0 %v860, 32
    %v863 = vpop.permute.xlu0 %862
    %v865 = vadd.f32 %v855, %v863
    %v866 = vtanh.pop %v865
    %868 = vrot.lane.b32.xlu0 %v866, 64
    %v869 = vpop.permute.xlu0 %868
    %v871 = vmul.f32 %v854, %v869
    %s872 = scalar_lea.vmem [#allocation2], 12
    %v873 = vld [vmem:[%s872] sm:$0x3]
    %v874 = vsel %vm160, %v819, 0
    %876 = vmatpush.msra.mxu0 0.0
    %877 = vmatpush.msra.mxu0 0.0
    %878 = vmatpush.msra.mxu0 0.0
    %879 = vmatpush.msra.mxu0 0.0
    %880 = vmatpush.msra.mxu0 0.0
    %881 = vmatpush.msra.mxu0 0.0
    %882 = vmatpush.msra.mxu0 0.0
    %883 = vmatpush.msra.mxu0 0.0
    %884 = vmatpush.msra.mxu0 0.0
    %885 = vmatpush.msra.mxu0 0.0
    %886 = vmatpush.msra.mxu0 0.0
    %887 = vmatpush.msra.mxu0 0.0
    %888 = vmatpush.msra.mxu0 %v239
    %889 = vmatpush.msra.mxu0 %v238
    %890 = vmatpush.msra.mxu0 %v237
    %891 = vmatpush.msra.mxu0 %v236
    %892 = vmatmul.f32.gmra.mxu0 %v874
    %v893 = vpop.f32.mrf.mxu0
    %v894 = vadd.f32 0.0, %v893
    %895 = vdwg.mxu0
    %v896 = vadd.f32 %v873, %v894
    %v897 = vmul.f32 %v896, 0.5
    %v898 = vsel %vm253, %v896, %v897
    %v899 = vtanh.pop %v898
    %v900 = vmul.f32 %v899, 0.5
    %v901 = vadd.f32 %v900, 0.5
    %v902 = vsel %vm253, %v899, %v901
    %v903 = vmul.f32 %v902, %v810
    %905 = vrot.lane.b32.xlu0 %v902, 64
    %v906 = vpop.permute.xlu0 %905
    %v908 = vmul.f32 %v902, %v906
    %910 = vrot.lane.b32.xlu0 %v908, 32
    %v911 = vpop.permute.xlu0 %910
    %v913 = vadd.f32 %v903, %v911
    %v914 = vtanh.pop %v913
    %916 = vrot.lane.b32.xlu0 %v914, 64
    %v917 = vpop.permute.xlu0 %916
    %v919 = vmul.f32 %v902, %v917
    %921 = vrot.lane.b32.xlu0 %v919, 32
    %v922 = vpop.permute.xlu0 %921
    %925 = vrot.lane.b32.xlu0 %v871, 64
    %v926 = vpop.permute.xlu0 %925
    %v928 = vsel %vm160, %v922, %v926
    %v930 = vsel %vm310, %v928, 0
    %932 = vmatpush.msra.mxu0 0.0
    %933 = vmatpush.msra.mxu0 0.0
    %934 = vmatpush.msra.mxu0 0.0
    %935 = vmatpush.msra.mxu0 0.0
    %936 = vmatpush.msra.mxu0 0.0
    %937 = vmatpush.msra.mxu0 0.0
    %938 = vmatpush.msra.mxu0 0.0
    %939 = vmatpush.msra.mxu0 0.0
    %940 = vmatpush.msra.mxu0 %v247
    %941 = vmatpush.msra.mxu0 %v246
    %942 = vmatpush.msra.mxu0 %v245
    %943 = vmatpush.msra.mxu0 %v244
    %944 = vmatpush.msra.mxu0 %v243
    %945 = vmatpush.msra.mxu0 %v242
    %946 = vmatpush.msra.mxu0 %v241
    %947 = vmatpush.msra.mxu0 %v240
    %948 = vmatmul.f32.gmra.mxu0 %v930
    %v949 = vpop.f32.mrf.mxu0
    %v950 = vadd.f32 %v308, %v949
    %951 = vdwg.mxu0
    %v952 = vmul.f32 %v950, 0.5
    %v953 = vsel %vm253, %v950, %v952
    %v954 = vtanh.pop %v953
    %v955 = vmul.f32 %v954, 0.5
    %v956 = vadd.f32 %v955, 0.5
    %v957 = vsel %vm253, %v954, %v956
    %v958 = vmul.f32 %v957, %v865
    %960 = vrot.lane.b32.xlu0 %v957, 64
    %v961 = vpop.permute.xlu0 %960
    %v963 = vmul.f32 %v957, %v961
    %965 = vrot.lane.b32.xlu0 %v963, 32
    %v966 = vpop.permute.xlu0 %965
    %v968 = vadd.f32 %v958, %v966
    %v969 = vtanh.pop %v968
    %971 = vrot.lane.b32.xlu0 %v969, 64
    %v972 = vpop.permute.xlu0 %971
    %v974 = vmul.f32 %v957, %v972
    %s975 = scalar_lea.vmem [#allocation2], 14
    %v976 = vld [vmem:[%s975] sm:$0x3]
    %v977 = vsel %vm160, %v922, 0
    %979 = vmatpush.msra.mxu0 0.0
    %980 = vmatpush.msra.mxu0 0.0
    %981 = vmatpush.msra.mxu0 0.0
    %982 = vmatpush.msra.mxu0 0.0
    %983 = vmatpush.msra.mxu0 0.0
    %984 = vmatpush.msra.mxu0 0.0
    %985 = vmatpush.msra.mxu0 0.0
    %986 = vmatpush.msra.mxu0 0.0
    %987 = vmatpush.msra.mxu0 0.0
    %988 = vmatpush.msra.mxu0 0.0
    %989 = vmatpush.msra.mxu0 0.0
    %990 = vmatpush.msra.mxu0 0.0
    %991 = vmatpush.msra.mxu0 %v239
    %992 = vmatpush.msra.mxu0 %v238
    %993 = vmatpush.msra.mxu0 %v237
    %994 = vmatpush.msra.mxu0 %v236
    %995 = vmatmul.f32.gmra.mxu0 %v977
    %v996 = vpop.f32.mrf.mxu0
    %v997 = vadd.f32 0.0, %v996
    %998 = vdwg.mxu0
    %v999 = vadd.f32 %v976, %v997
    %v1000 = vmul.f32 %v999, 0.5
    %v1001 = vsel %vm253, %v999, %v1000
    %v1002 = vtanh.pop %v1001
    %v1003 = vmul.f32 %v1002, 0.5
    %v1004 = vadd.f32 %v1003, 0.5
    %v1005 = vsel %vm253, %v1002, %v1004
    %v1006 = vmul.f32 %v1005, %v913
    %1008 = vrot.lane.b32.xlu0 %v1005, 64
    %v1009 = vpop.permute.xlu0 %1008
    %v1011 = vmul.f32 %v1005, %v1009
    %1013 = vrot.lane.b32.xlu0 %v1011, 32
    %v1014 = vpop.permute.xlu0 %1013
    %v1016 = vadd.f32 %v1006, %v1014
    %v1017 = vtanh.pop %v1016
    %1019 = vrot.lane.b32.xlu0 %v1017, 64
    %v1020 = vpop.permute.xlu0 %1019
    %v1022 = vmul.f32 %v1005, %v1020
    %1024 = vrot.lane.b32.xlu0 %v1022, 32
    %v1025 = vpop.permute.xlu0 %1024
    %1028 = vrot.lane.b32.xlu0 %v974, 64
    %v1029 = vpop.permute.xlu0 %1028
    %v1031 = vsel %vm160, %v1025, %v1029
    %v1033 = vsel %vm310, %v1031, 0
    %1035 = vmatpush.msra.mxu0 0.0
    %1036 = vmatpush.msra.mxu0 0.0
    %1037 = vmatpush.msra.mxu0 0.0
    %1038 = vmatpush.msra.mxu0 0.0
    %1039 = vmatpush.msra.mxu0 0.0
    %1040 = vmatpush.msra.mxu0 0.0
    %1041 = vmatpush.msra.mxu0 0.0
    %1042 = vmatpush.msra.mxu0 0.0
    %1043 = vmatpush.msra.mxu0 %v247
    %1044 = vmatpush.msra.mxu0 %v246
    %1045 = vmatpush.msra.mxu0 %v245
    %1046 = vmatpush.msra.mxu0 %v244
    %1047 = vmatpush.msra.mxu0 %v243
    %1048 = vmatpush.msra.mxu0 %v242
    %1049 = vmatpush.msra.mxu0 %v241
    %1050 = vmatpush.msra.mxu0 %v240
    %1051 = vmatmul.f32.gmra.mxu0 %v1033
    %v1052 = vpop.f32.mrf.mxu0
    %v1053 = vadd.f32 %v308, %v1052
    %1054 = vdwg.mxu0
    %v1055 = vmul.f32 %v1053, 0.5
    %v1056 = vsel %vm253, %v1053, %v1055
    %v1057 = vtanh.pop %v1056
    %v1058 = vmul.f32 %v1057, 0.5
    %v1059 = vadd.f32 %v1058, 0.5
    %v1060 = vsel %vm253, %v1057, %v1059
    %v1061 = vmul.f32 %v1060, %v968
    %1063 = vrot.lane.b32.xlu0 %v1060, 64
    %v1064 = vpop.permute.xlu0 %1063
    %v1066 = vmul.f32 %v1060, %v1064
    %1068 = vrot.lane.b32.xlu0 %v1066, 32
    %v1069 = vpop.permute.xlu0 %1068
    %v1071 = vadd.f32 %v1061, %v1069
    %v1072 = vtanh.pop %v1071
    %1074 = vrot.lane.b32.xlu0 %v1072, 64
    %v1075 = vpop.permute.xlu0 %1074
    %v1077 = vmul.f32 %v1060, %v1075
    %1079 = vrot.lane.b32.xlu0 %v1077, 32
    %v1080 = vpop.permute.xlu0 %1079
    %vm1082 = vcmask 254976
    %1083 = vst.msk [vmem:[#allocation12] sm:$0x3] %vm1082, %v1080
    // Predicated region
    $region54: #{tpu_custom_call.1} parent=1 // pred_check
      _
    $region55: #{tpu_custom_call.1} parent=1 // pred_check_branch
      %1085 = sbr.rel (0) target = $region57
    $region56: #{tpu_custom_call.1} parent=1 // pred_region
      %1087 = vsyncadd [#allocation5], 0
      %s1089 = sshll.u32 [#allocation12], 4
      %s1090 = int_to_ptr.vmem [resolvable:$true] %s1089
      %s1091 = sshll.u32 %s8, 4
      %s1092 = int_to_ptr.hbm [resolvable:$true] %s1091
      %1094 = dma.vmem_to_hbm [thread:$0]  %s1090, 32, %s1092, [#allocation5]
    $region57: #{tpu_custom_call.1} parent=1 // pred_fallthru
      _
    // Predicated region
    $region58: #{tpu_custom_call.1} parent=1 // pred_check
      _
    $region59: #{tpu_custom_call.1} parent=1 // pred_check_branch
      %1096 = sbr.rel (0) target = $region61
    $region60: #{tpu_custom_call.1} parent=1 // pred_region
      %1098 = dma.done [#allocation5], 32
    $region61: #{tpu_custom_call.1} parent=1 // pred_fallthru
      _
    %1099 = vsyncpa [#allocation4], 1
    %1100 = vsyncpa [#allocation7], 1
    %1101 = vsyncpa [#allocation10], 1
    %1102 = vsyncpa [#allocation5], 1

</llo_original>
